<compile_context>
chip_gen: v5e
topology: v5e:2x2
jax: 0.10.0
libtpu: 0.0.40
codegen_flags: <defaults>
</compile_context>

<pallas_src>
import functools
import math

import jax
import jax.numpy as jnp
from jax import lax
from jax.experimental import pallas as pl
from jax.experimental.pallas import tpu as pltpu


def _round_up(x, m):
    return (x + m - 1) // m * m


def _sigmoid(x):
    # Exact identity sigmoid(x) = 0.5*(tanh(x/2)+1): transcendental stays on
    # the EUP, no divide in the VALU slots of the recurrence critical path.
    return 0.5 * jnp.tanh(0.5 * x) + 0.5


def encoder_rnn_kernel(x_ref, h0_ref,
                       wcomb_ref, bcomb_ref,
                       whh_ref, bhhn_ref,
                       wout_ref, bout_ref,
                       out_ref, hN_ref,
                       gi_scr, hist_scr,
                       *, T, Tc, Bp, Hp, I, unroll):
    """One grid step = one time-chunk of Tc steps.

    x_ref:    (Tc*Bp, I)   time-major, batch-padded input rows for this chunk
    h0_ref:   (Bp, Hp)     initial hidden state (padded lanes/rows are zero)
    wcomb_ref:(I, 3*Hp)    folded layer1+W_ih weights, per-gate lane-padded
    bcomb_ref:(1, 3*Hp)    folded bias (includes bhh_r, bhh_z)
    whh_ref:  (Hp, 3*Hp)   recurrent weights, per-gate lane-padded
    bhhn_ref: (1, Hp)      recurrent bias of the n gate (multiplied by r)
    wout_ref: (Hp, Cp), bout_ref: (1, Cp)
    out_ref:  (Tc*Bp, Cp)  per-step projected output for this chunk
    hN_ref:   (Bp, Hp)     resident across the grid -> carries h between chunks
    gi_scr:   (Tc*Bp, 3Hp) f32 scratch -- precomputed input gates (this chunk)
    hist_scr: (Tc*Bp, Hp)  f32 scratch -- per-step hidden history (this chunk)
    """
    c = pl.program_id(0)

    # hN_ref is the cross-chunk h carrier (same block index every grid step).
    @pl.when(c == 0)
    def _():
        hN_ref[...] = h0_ref[...]

    # ---- input-side gates for the whole chunk, computed once -------------
    if I == 1:
        # K=1 contraction: VPU outer product (lane-broadcast x, sublane-
        # broadcast w_comb) -- skips the nearly-empty, multi-pass f32 MXU op.
        gi_scr[...] = x_ref[...] * wcomb_ref[...] + bcomb_ref[...]
    else:
        gi_scr[...] = (
            jnp.dot(x_ref[...], wcomb_ref[...],
                    preferred_element_type=jnp.float32)
            + bcomb_ref[...]
        )

    # Hoist the bhh_n broadcast (1 vreg) out of the time loop.
    bhhn = jnp.broadcast_to(bhhn_ref[...], (Bp, Hp))

    def step(t, h_prev):
        row = pl.multiple_of(t * Bp, Bp)
        gi = gi_scr[pl.ds(row, Bp), :]                              # (Bp, 3Hp)
        # Re-read whh from VMEM each step (3 vld/cycle is cheap) rather than
        # keeping a 192 KiB value live across the unrolled loop (spills).
        gh = jnp.dot(h_prev, whh_ref[...],
                     preferred_element_type=jnp.float32)

        # PyTorch GRU gate order: r, z, n (lane-aligned 128-wide blocks).
        r = _sigmoid(gi[:, 0:Hp] + gh[:, 0:Hp])
        z = _sigmoid(gi[:, Hp:2 * Hp] + gh[:, Hp:2 * Hp])
        n = jnp.tanh(gi[:, 2 * Hp:3 * Hp] + r * (gh[:, 2 * Hp:3 * Hp] + bhhn))
        # h' = (1-z)*n + z*h, rewritten with one fewer op on the serial chain.
        h_new = n + z * (h_prev - n)

        if T % Tc != 0:
            # Padded tail timesteps must not advance the recurrence.
            h_new = jnp.where(c * Tc + t < T, h_new, h_prev)

        hist_scr[pl.ds(row, Bp), :] = h_new
        return h_new

    h_final = lax.fori_loop(0, Tc, step, hN_ref[...], unroll=unroll)
    hN_ref[...] = h_final

    # Single lane-dense output projection + store for the whole chunk.
    out_ref[...] = (
        jnp.dot(hist_scr[...], wout_ref[...],
                preferred_element_type=jnp.float32)
        + bout_ref[...]
    ).astype(out_ref.dtype)


def encoder_rnn_forward(x, hidden, params, *, time_chunk=64):
    """x: (B, T, I) float32, hidden: (1, B, H) float32.

    Returns (output (B*T, C), hidden (1, B, H)) matching EncoderRNN.forward.
    """
    B, T, I = x.shape
    H = params["whh"].shape[0]
    C = params["wout"].shape[1]
    E = params["w1"].shape[1]

    Bp = _round_up(B, 8)
    Hp = _round_up(H, 128)
    Cp = _round_up(C, 128)
    f32 = jnp.float32

    Tc = min(T, time_chunk)
    num_chunks = -(-T // Tc)
    Tpad = num_chunks * Tc
    unroll = min(Tc, 8)

    w1 = params["w1"].astype(f32)
    b1 = params["b1"].astype(f32).reshape(1, E)
    wih = params["wih"].astype(f32)
    whh = params["whh"].astype(f32)
    bih = params["bih"].astype(f32).reshape(1, 3 * H)
    bhh = params["bhh"].astype(f32).reshape(1, 3 * H)
    wout = params["wout"].astype(f32)
    bout = params["bout"].astype(f32).reshape(1, C)

    # Fold layer1 into the GRU input projection (exact: layer1 is affine).
    w_comb = w1 @ wih                          # (I, 3H)
    b_comb = b1 @ wih + bih                    # (1, 3H)
    # Fold bhh_r / bhh_z into the input-side bias; keep bhh_n (multiplied by r).
    b_comb = b_comb.at[:, 0:2 * H].add(bhh[:, 0:2 * H])
    bhh_n = bhh[:, 2 * H:3 * H]                # (1, H)

    def pad_gate_cols(w):
        # (rows, 3H) -> (rows, 3*Hp): each gate gets its own 128-lane block.
        parts = [jnp.pad(w[:, g * H:(g + 1) * H], ((0, 0), (0, Hp - H)))
                 for g in range(3)]
        return jnp.concatenate(parts, axis=1)

    w_comb_p = pad_gate_cols(w_comb)                               # (I, 3Hp)
    b_comb_p = pad_gate_cols(b_comb)                               # (1, 3Hp)
    whh_p = pad_gate_cols(jnp.pad(whh, ((0, Hp - H), (0, 0))))     # (Hp, 3Hp)
    bhh_n_p = jnp.pad(bhh_n, ((0, 0), (0, Hp - H)))                # (1, Hp)
    wout_p = jnp.pad(wout, ((0, Hp - H), (0, Cp - C)))             # (Hp, Cp)
    bout_p = jnp.pad(bout, ((0, 0), (0, Cp - C)))                  # (1, Cp)

    # Time-major, batch- and time-padded input, flattened so row = t*Bp + b.
    x_tm = jnp.transpose(x.astype(f32), (1, 0, 2))                 # (T, B, I)
    x_tm = jnp.pad(x_tm, ((0, Tpad - T), (0, Bp - B), (0, 0)))     # (Tpad,Bp,I)
    x2d = x_tm.reshape(Tpad * Bp, I)

    h0 = jnp.pad(hidden[0].astype(f32), ((0, Bp - B), (0, Hp - H)))  # (Bp, Hp)

    kernel = functools.partial(encoder_rnn_kernel, T=T, Tc=Tc, Bp=Bp, Hp=Hp,
                               I=I, unroll=unroll)

    # --- VMEM budget from actual block/scratch sizes (v5e scoped default is
    # only 16 MiB; stay well under v7x's 64 MiB physical). ------------------
    def nbytes(shape):
        return 4 * math.prod(shape)

    io_block_bytes = (nbytes((Tc * Bp, I)) + nbytes((Bp, Hp))
                      + nbytes((I, 3 * Hp)) + nbytes((1, 3 * Hp))
                      + nbytes((Hp, 3 * Hp)) + nbytes((1, Hp))
                      + nbytes((Hp, Cp)) + nbytes((1, Cp))
                      + nbytes((Tc * Bp, Cp)) + nbytes((Bp, Hp)))
    scratch_bytes = nbytes((Tc * Bp, 3 * Hp)) + nbytes((Tc * Bp, Hp))
    vmem_limit = min(2 * io_block_bytes + scratch_bytes + (4 << 20), 48 << 20)

    cost = pl.CostEstimate(
        flops=(2 * Tpad * Bp * I * 3 * Hp            # input gates
               + 2 * Tpad * Bp * Hp * 3 * Hp         # recurrent matmuls
               + 2 * Tpad * Bp * Hp * Cp             # output projection
               + 12 * Tpad * Bp * Hp),               # gate VPU math
        transcendentals=3 * Tpad * Bp * Hp,
        bytes_accessed=(nbytes((Tpad * Bp, I)) + nbytes((Bp, Hp))
                        + nbytes((I, 3 * Hp)) + nbytes((1, 3 * Hp))
                        + nbytes((Hp, 3 * Hp)) + nbytes((1, Hp))
                        + nbytes((Hp, Cp)) + nbytes((1, Cp))
                        + nbytes((Tpad * Bp, Cp)) + nbytes((Bp, Hp))),
    )

    grid_spec = pltpu.PrefetchScalarGridSpec(
        num_scalar_prefetch=0,
        grid=(num_chunks,),
        in_specs=[
            pl.BlockSpec((Tc * Bp, I), lambda c: (c, 0)),      # x chunk
            pl.BlockSpec((Bp, Hp), lambda c: (0, 0)),          # h0
            pl.BlockSpec((I, 3 * Hp), lambda c: (0, 0)),       # w_comb
            pl.BlockSpec((1, 3 * Hp), lambda c: (0, 0)),       # b_comb
            pl.BlockSpec((Hp, 3 * Hp), lambda c: (0, 0)),      # whh
            pl.BlockSpec((1, Hp), lambda c: (0, 0)),           # bhh_n
            pl.BlockSpec((Hp, Cp), lambda c: (0, 0)),          # wout
            pl.BlockSpec((1, Cp), lambda c: (0, 0)),           # bout
        ],
        out_specs=[
            pl.BlockSpec((Tc * Bp, Cp), lambda c: (c, 0)),     # out chunk
            pl.BlockSpec((Bp, Hp), lambda c: (0, 0)),          # hN (resident)
        ],
        scratch_shapes=[pltpu.VMEM((Tc * Bp, 3 * Hp), f32),    # gi (chunk)
                        pltpu.VMEM((Tc * Bp, Hp), f32)],       # h history
    )

    out_p, hN_p = pl.pallas_call(
        kernel,
        out_shape=(jax.ShapeDtypeStruct((Tpad * Bp, Cp), f32),
                   jax.ShapeDtypeStruct((Bp, Hp), f32)),
        grid_spec=grid_spec,
        compiler_params=pltpu.CompilerParams(
            dimension_semantics=("arbitrary",),   # recurrence: sequential chunks
            vmem_limit_bytes=int(vmem_limit)),
        cost_estimate=cost,
    )(x2d, h0, w_comb_p, b_comb_p, whh_p, bhh_n_p, wout_p, bout_p)

    out = out_p.reshape(Tpad, Bp, Cp)[:T, :B, :C]             # strip padding
    output = jnp.transpose(out, (1, 0, 2)).reshape(B * T, C)   # batch_first .view
    hidden_n = hN_p[:B, :H][None]                              # (1, B, H)
    return output, hidden_n


def init_params(key, input_size, embed_size, hidden_size, n_classes):
    """Deterministic PyTorch-like uniform init; weights pre-transposed for x @ W."""
    ks = jax.random.split(key, 8)

    def u(k, shape, fan_in):
        bound = 1.0 / jnp.sqrt(float(fan_in))
        return jax.random.uniform(k, shape, jnp.float32, -bound, bound)

    return {
        "w1": u(ks[0], (input_size, embed_size), input_size),
        "b1": u(ks[1], (1, embed_size), input_size),
        "wih": u(ks[2], (embed_size, 3 * hidden_size), hidden_size),
        "whh": u(ks[3], (hidden_size, 3 * hidden_size), hidden_size),
        "bih": u(ks[4], (1, 3 * hidden_size), hidden_size),
        "bhh": u(ks[5], (1, 3 * hidden_size), hidden_size),
        "wout": u(ks[6], (hidden_size, n_classes), hidden_size),
        "bout": u(ks[7], (1, n_classes), hidden_size),
    }


def _reference_forward(x, hidden, params):
    """Pure-JAX reference matching the PyTorch module (for validation)."""
    B, T, I = x.shape
    H = params["whh"].shape[0]
    C = params["wout"].shape[1]
    emb = x @ params["w1"] + params["b1"]                     # (B, T, E)
    h = hidden[0]                                             # (B, H)
    outs = []
    for t in range(T):
        gi = emb[:, t, :] @ params["wih"] + params["bih"]
        gh = h @ params["whh"] + params["bhh"]
        r = jax.nn.sigmoid(gi[:, 0:H] + gh[:, 0:H])
        z = jax.nn.sigmoid(gi[:, H:2 * H] + gh[:, H:2 * H])
        n = jnp.tanh(gi[:, 2 * H:3 * H] + r * gh[:, 2 * H:3 * H])
        h = (1.0 - z) * n + z * h
        outs.append(h)
    hs = jnp.stack(outs, axis=1)                              # (B, T, H)
    out = (hs @ params["wout"] + params["bout"]).reshape(B * T, C)
    return out, h[None]


if __name__ == "__main__":
    batch_size = 2
    n_seq = 8
    input_size = 1
    embed_size = 10
    hidden_size = 50
    n_classes = 1

    key = jax.random.PRNGKey(0)
    k_param, k_x = jax.random.split(key)
    params = init_params(k_param, input_size, embed_size, hidden_size, n_classes)

    x = jax.random.normal(k_x, (batch_size, n_seq, input_size), jnp.float32)
    hidden0 = jnp.zeros((1, batch_size, hidden_size), jnp.float32)

    output, hidden_n = encoder_rnn_forward(x, hidden0, params)
    jax.block_until_ready((output, hidden_n))

    assert output.shape == (batch_size * n_seq, n_classes)
    assert hidden_n.shape == (1, batch_size, hidden_size)

    ref_out, ref_hidden = _reference_forward(x, hidden0, params)
    assert jnp.allclose(output, ref_out, rtol=1e-4, atol=2e-4)
    assert jnp.allclose(hidden_n, ref_hidden, rtol=1e-4, atol=2e-4)

    print("KERNEL_OK")
</pallas_src>

<mosaic_0001>
module attributes {stable_mosaic.version = 11 : i64} {
  func.func @encoder_rnn_kernel(%arg0: i32, %arg1: memref<64x1xf32, #tpu.memory_space<vmem>>, %arg2: memref<8x128xf32, #tpu.memory_space<vmem>>, %arg3: memref<1x384xf32, #tpu.memory_space<vmem>>, %arg4: memref<1x384xf32, #tpu.memory_space<vmem>>, %arg5: memref<128x384xf32, #tpu.memory_space<vmem>>, %arg6: memref<1x128xf32, #tpu.memory_space<vmem>>, %arg7: memref<128x128xf32, #tpu.memory_space<vmem>>, %arg8: memref<1x128xf32, #tpu.memory_space<vmem>>, %arg9: memref<64x128xf32, #tpu.memory_space<vmem>>, %arg10: memref<8x128xf32, #tpu.memory_space<vmem>>, %arg11: memref<64x384xf32, #tpu.memory_space<vmem>>, %arg12: memref<64x128xf32, #tpu.memory_space<vmem>>) attributes {dimension_semantics = [#tpu.dimension_semantics<arbitrary>], iteration_bounds = array<i64: 1>, scalar_prefetch = 0 : i64, scratch_operands = 2 : i64, tpu.core_type = #tpu.core_type<tc>, window_params = [{transform_indices = @transform_0, window_bounds = array<i64: 64, 1>}, {pipeline_mode = #tpu.pipeline_mode<synchronous>, transform_indices = @transform_1, window_bounds = array<i64: 8, 128>}, {pipeline_mode = #tpu.pipeline_mode<synchronous>, transform_indices = @transform_2, window_bounds = array<i64: 1, 384>}, {pipeline_mode = #tpu.pipeline_mode<synchronous>, transform_indices = @transform_3, window_bounds = array<i64: 1, 384>}, {pipeline_mode = #tpu.pipeline_mode<synchronous>, transform_indices = @transform_4, window_bounds = array<i64: 128, 384>}, {pipeline_mode = #tpu.pipeline_mode<synchronous>, transform_indices = @transform_5, window_bounds = array<i64: 1, 128>}, {pipeline_mode = #tpu.pipeline_mode<synchronous>, transform_indices = @transform_6, window_bounds = array<i64: 128, 128>}, {pipeline_mode = #tpu.pipeline_mode<synchronous>, transform_indices = @transform_7, window_bounds = array<i64: 1, 128>}, {transform_indices = @transform_8, window_bounds = array<i64: 64, 128>}, {pipeline_mode = #tpu.pipeline_mode<synchronous>, transform_indices = @transform_9, window_bounds = array<i64: 8, 128>}]} {
    %c0_i32 = arith.constant 0 : i32
    %0 = arith.cmpi eq, %arg0, %c0_i32 : i32
    %1 = arith.extui %0 : i1 to i32
    %c0_i32_0 = arith.constant 0 : i32
    %2 = arith.cmpi ne, %1, %c0_i32_0 : i32
    scf.if %2 {
      %c0_119 = arith.constant 0 : index
      %c0_120 = arith.constant 0 : index
      %320 = vector.load %arg2[%c0_119, %c0_120] : memref<8x128xf32, #tpu.memory_space<vmem>>, vector<8x128xf32>
      %c0_121 = arith.constant 0 : index
      %c0_122 = arith.constant 0 : index
      %321 = vector.load %arg10[%c0_121, %c0_122] : memref<8x128xf32, #tpu.memory_space<vmem>>, vector<8x128xf32>
      tpu.vector_store %arg10[%c0_121, %c0_122], %320 {strides = array<i32>} : memref<8x128xf32, #tpu.memory_space<vmem>>, vector<8x128xf32>,
    } else {
    }
    %c0 = arith.constant 0 : index
    %c0_1 = arith.constant 0 : index
    %3 = vector.load %arg1[%c0, %c0_1] : memref<64x1xf32, #tpu.memory_space<vmem>>, vector<64x1xf32>
    %c0_2 = arith.constant 0 : index
    %c0_3 = arith.constant 0 : index
    %4 = vector.load %arg3[%c0_2, %c0_3] : memref<1x384xf32, #tpu.memory_space<vmem>>, vector<1x384xf32>
    %5 = vector.broadcast %3 : vector<64x1xf32> to vector<64x384xf32>
    %6 = vector.broadcast %4 : vector<1x384xf32> to vector<64x384xf32>
    %7 = arith.mulf %5, %6 : vector<64x384xf32>
    %c0_4 = arith.constant 0 : index
    %c0_5 = arith.constant 0 : index
    %8 = vector.load %arg4[%c0_4, %c0_5] : memref<1x384xf32, #tpu.memory_space<vmem>>, vector<1x384xf32>
    %9 = vector.broadcast %8 : vector<1x384xf32> to vector<64x384xf32>
    %10 = arith.addf %7, %9 : vector<64x384xf32>
    %c0_6 = arith.constant 0 : index
    %c0_7 = arith.constant 0 : index
    %11 = vector.load %arg11[%c0_6, %c0_7] : memref<64x384xf32, #tpu.memory_space<vmem>>, vector<64x384xf32>
    tpu.vector_store %arg11[%c0_6, %c0_7], %10 {strides = array<i32>} : memref<64x384xf32, #tpu.memory_space<vmem>>, vector<64x384xf32>,
    %c0_8 = arith.constant 0 : index
    %c0_9 = arith.constant 0 : index
    %12 = vector.load %arg6[%c0_8, %c0_9] : memref<1x128xf32, #tpu.memory_space<vmem>>, vector<1x128xf32>
    %13 = vector.shape_cast %12 : vector<1x128xf32> to vector<1x128xf32>
    %14 = vector.broadcast %13 : vector<1x128xf32> to vector<8x128xf32>
    %c0_10 = arith.constant 0 : index
    %c0_11 = arith.constant 0 : index
    %15 = vector.load %arg10[%c0_10, %c0_11] : memref<8x128xf32, #tpu.memory_space<vmem>>, vector<8x128xf32>
    %c0_i32_12 = arith.constant 0 : i32
    %c8_i32 = arith.constant 8 : i32
    %16 = arith.muli %c0_i32_12, %c8_i32 : i32
    %17 = tpu.assume_multiple %16, 8 : i32
    %18 = arith.index_cast %17 : i32 to index
    %c0_13 = arith.constant 0 : index
    %19 = vector.load %arg11[%18, %c0_13] : memref<64x384xf32, #tpu.memory_space<vmem>>, vector<8x384xf32>
    %c0_14 = arith.constant 0 : index
    %c0_15 = arith.constant 0 : index
    %20 = vector.load %arg5[%c0_14, %c0_15] : memref<128x384xf32, #tpu.memory_space<vmem>>, vector<128x384xf32>
    %cst = arith.constant dense<0.000000e+00> : vector<8x384xf32>
    %21 = tpu.matmul %15, %20, %cst {dimension_numbers = #tpu.dot_dimension_numbers<[1], [0], [0], [1], [0, 0, 1, 1], [], []>} : vector<8x128xf32>, vector<128x384xf32>, vector<8x384xf32> -> vector<8x384xf32>
    %22 = vector.extract_strided_slice %19 {offsets = [0, 0], sizes = [8, 128], strides = [1, 1]} : vector<8x384xf32> to vector<8x128xf32>
    %23 = vector.extract_strided_slice %21 {offsets = [0, 0], sizes = [8, 128], strides = [1, 1]} : vector<8x384xf32> to vector<8x128xf32>
    %24 = arith.addf %22, %23 : vector<8x128xf32>
    %cst_16 = arith.constant 5.000000e-01 : f32
    %25 = vector.broadcast %cst_16 : f32 to vector<8x128xf32>
    %26 = arith.mulf %25, %24 : vector<8x128xf32>
    %27 = math.tanh %26 : vector<8x128xf32>
    %cst_17 = arith.constant 5.000000e-01 : f32
    %28 = vector.broadcast %cst_17 : f32 to vector<8x128xf32>
    %29 = arith.mulf %28, %27 : vector<8x128xf32>
    %cst_18 = arith.constant 5.000000e-01 : f32
    %30 = vector.broadcast %cst_18 : f32 to vector<8x128xf32>
    %31 = arith.addf %29, %30 : vector<8x128xf32>
    %32 = vector.extract_strided_slice %19 {offsets = [0, 128], sizes = [8, 128], strides = [1, 1]} : vector<8x384xf32> to vector<8x128xf32>
    %33 = vector.extract_strided_slice %21 {offsets = [0, 128], sizes = [8, 128], strides = [1, 1]} : vector<8x384xf32> to vector<8x128xf32>
    %34 = arith.addf %32, %33 : vector<8x128xf32>
    %cst_19 = arith.constant 5.000000e-01 : f32
    %35 = vector.broadcast %cst_19 : f32 to vector<8x128xf32>
    %36 = arith.mulf %35, %34 : vector<8x128xf32>
    %37 = math.tanh %36 : vector<8x128xf32>
    %cst_20 = arith.constant 5.000000e-01 : f32
    %38 = vector.broadcast %cst_20 : f32 to vector<8x128xf32>
    %39 = arith.mulf %38, %37 : vector<8x128xf32>
    %cst_21 = arith.constant 5.000000e-01 : f32
    %40 = vector.broadcast %cst_21 : f32 to vector<8x128xf32>
    %41 = arith.addf %39, %40 : vector<8x128xf32>
    %42 = vector.extract_strided_slice %19 {offsets = [0, 256], sizes = [8, 128], strides = [1, 1]} : vector<8x384xf32> to vector<8x128xf32>
    %43 = vector.extract_strided_slice %21 {offsets = [0, 256], sizes = [8, 128], strides = [1, 1]} : vector<8x384xf32> to vector<8x128xf32>
    %44 = arith.addf %43, %14 : vector<8x128xf32>
    %45 = arith.mulf %31, %44 : vector<8x128xf32>
    %46 = arith.addf %42, %45 : vector<8x128xf32>
    %47 = math.tanh %46 : vector<8x128xf32>
    %48 = arith.subf %15, %47 : vector<8x128xf32>
    %49 = arith.mulf %41, %48 : vector<8x128xf32>
    %50 = arith.addf %47, %49 : vector<8x128xf32>
    %51 = arith.index_cast %17 : i32 to index
    %c0_22 = arith.constant 0 : index
    %52 = vector.load %arg12[%51, %c0_22] : memref<64x128xf32, #tpu.memory_space<vmem>>, vector<8x128xf32>
    tpu.vector_store %arg12[%51, %c0_22], %50 {strides = array<i32>} : memref<64x128xf32, #tpu.memory_space<vmem>>, vector<8x128xf32>,
    %c1_i32 = arith.constant 1 : i32
    %c8_i32_23 = arith.constant 8 : i32
    %53 = arith.muli %c1_i32, %c8_i32_23 : i32
    %54 = tpu.assume_multiple %53, 8 : i32
    %55 = arith.index_cast %54 : i32 to index
    %c0_24 = arith.constant 0 : index
    %56 = vector.load %arg11[%55, %c0_24] : memref<64x384xf32, #tpu.memory_space<vmem>>, vector<8x384xf32>
    %c0_25 = arith.constant 0 : index
    %c0_26 = arith.constant 0 : index
    %57 = vector.load %arg5[%c0_25, %c0_26] : memref<128x384xf32, #tpu.memory_space<vmem>>, vector<128x384xf32>
    %cst_27 = arith.constant dense<0.000000e+00> : vector<8x384xf32>
    %58 = tpu.matmul %50, %57, %cst_27 {dimension_numbers = #tpu.dot_dimension_numbers<[1], [0], [0], [1], [0, 0, 1, 1], [], []>} : vector<8x128xf32>, vector<128x384xf32>, vector<8x384xf32> -> vector<8x384xf32>
    %59 = vector.extract_strided_slice %56 {offsets = [0, 0], sizes = [8, 128], strides = [1, 1]} : vector<8x384xf32> to vector<8x128xf32>
    %60 = vector.extract_strided_slice %58 {offsets = [0, 0], sizes = [8, 128], strides = [1, 1]} : vector<8x384xf32> to vector<8x128xf32>
    %61 = arith.addf %59, %60 : vector<8x128xf32>
    %cst_28 = arith.constant 5.000000e-01 : f32
    %62 = vector.broadcast %cst_28 : f32 to vector<8x128xf32>
    %63 = arith.mulf %62, %61 : vector<8x128xf32>
    %64 = math.tanh %63 : vector<8x128xf32>
    %cst_29 = arith.constant 5.000000e-01 : f32
    %65 = vector.broadcast %cst_29 : f32 to vector<8x128xf32>
    %66 = arith.mulf %65, %64 : vector<8x128xf32>
    %cst_30 = arith.constant 5.000000e-01 : f32
    %67 = vector.broadcast %cst_30 : f32 to vector<8x128xf32>
    %68 = arith.addf %66, %67 : vector<8x128xf32>
    %69 = vector.extract_strided_slice %56 {offsets = [0, 128], sizes = [8, 128], strides = [1, 1]} : vector<8x384xf32> to vector<8x128xf32>
    %70 = vector.extract_strided_slice %58 {offsets = [0, 128], sizes = [8, 128], strides = [1, 1]} : vector<8x384xf32> to vector<8x128xf32>
    %71 = arith.addf %69, %70 : vector<8x128xf32>
    %cst_31 = arith.constant 5.000000e-01 : f32
    %72 = vector.broadcast %cst_31 : f32 to vector<8x128xf32>
    %73 = arith.mulf %72, %71 : vector<8x128xf32>
    %74 = math.tanh %73 : vector<8x128xf32>
    %cst_32 = arith.constant 5.000000e-01 : f32
    %75 = vector.broadcast %cst_32 : f32 to vector<8x128xf32>
    %76 = arith.mulf %75, %74 : vector<8x128xf32>
    %cst_33 = arith.constant 5.000000e-01 : f32
    %77 = vector.broadcast %cst_33 : f32 to vector<8x128xf32>
    %78 = arith.addf %76, %77 : vector<8x128xf32>
    %79 = vector.extract_strided_slice %56 {offsets = [0, 256], sizes = [8, 128], strides = [1, 1]} : vector<8x384xf32> to vector<8x128xf32>
    %80 = vector.extract_strided_slice %58 {offsets = [0, 256], sizes = [8, 128], strides = [1, 1]} : vector<8x384xf32> to vector<8x128xf32>
    %81 = arith.addf %80, %14 : vector<8x128xf32>
    %82 = arith.mulf %68, %81 : vector<8x128xf32>
    %83 = arith.addf %79, %82 : vector<8x128xf32>
    %84 = math.tanh %83 : vector<8x128xf32>
    %85 = arith.subf %50, %84 : vector<8x128xf32>
    %86 = arith.mulf %78, %85 : vector<8x128xf32>
    %87 = arith.addf %84, %86 : vector<8x128xf32>
    %88 = arith.index_cast %54 : i32 to index
    %c0_34 = arith.constant 0 : index
    %89 = vector.load %arg12[%88, %c0_34] : memref<64x128xf32, #tpu.memory_space<vmem>>, vector<8x128xf32>
    tpu.vector_store %arg12[%88, %c0_34], %87 {strides = array<i32>} : memref<64x128xf32, #tpu.memory_space<vmem>>, vector<8x128xf32>,
    %c2_i32 = arith.constant 2 : i32
    %c8_i32_35 = arith.constant 8 : i32
    %90 = arith.muli %c2_i32, %c8_i32_35 : i32
    %91 = tpu.assume_multiple %90, 8 : i32
    %92 = arith.index_cast %91 : i32 to index
    %c0_36 = arith.constant 0 : index
    %93 = vector.load %arg11[%92, %c0_36] : memref<64x384xf32, #tpu.memory_space<vmem>>, vector<8x384xf32>
    %c0_37 = arith.constant 0 : index
    %c0_38 = arith.constant 0 : index
    %94 = vector.load %arg5[%c0_37, %c0_38] : memref<128x384xf32, #tpu.memory_space<vmem>>, vector<128x384xf32>
    %cst_39 = arith.constant dense<0.000000e+00> : vector<8x384xf32>
    %95 = tpu.matmul %87, %94, %cst_39 {dimension_numbers = #tpu.dot_dimension_numbers<[1], [0], [0], [1], [0, 0, 1, 1], [], []>} : vector<8x128xf32>, vector<128x384xf32>, vector<8x384xf32> -> vector<8x384xf32>
    %96 = vector.extract_strided_slice %93 {offsets = [0, 0], sizes = [8, 128], strides = [1, 1]} : vector<8x384xf32> to vector<8x128xf32>
    %97 = vector.extract_strided_slice %95 {offsets = [0, 0], sizes = [8, 128], strides = [1, 1]} : vector<8x384xf32> to vector<8x128xf32>
    %98 = arith.addf %96, %97 : vector<8x128xf32>
    %cst_40 = arith.constant 5.000000e-01 : f32
    %99 = vector.broadcast %cst_40 : f32 to vector<8x128xf32>
    %100 = arith.mulf %99, %98 : vector<8x128xf32>
    %101 = math.tanh %100 : vector<8x128xf32>
    %cst_41 = arith.constant 5.000000e-01 : f32
    %102 = vector.broadcast %cst_41 : f32 to vector<8x128xf32>
    %103 = arith.mulf %102, %101 : vector<8x128xf32>
    %cst_42 = arith.constant 5.000000e-01 : f32
    %104 = vector.broadcast %cst_42 : f32 to vector<8x128xf32>
    %105 = arith.addf %103, %104 : vector<8x128xf32>
    %106 = vector.extract_strided_slice %93 {offsets = [0, 128], sizes = [8, 128], strides = [1, 1]} : vector<8x384xf32> to vector<8x128xf32>
    %107 = vector.extract_strided_slice %95 {offsets = [0, 128], sizes = [8, 128], strides = [1, 1]} : vector<8x384xf32> to vector<8x128xf32>
    %108 = arith.addf %106, %107 : vector<8x128xf32>
    %cst_43 = arith.constant 5.000000e-01 : f32
    %109 = vector.broadcast %cst_43 : f32 to vector<8x128xf32>
    %110 = arith.mulf %109, %108 : vector<8x128xf32>
    %111 = math.tanh %110 : vector<8x128xf32>
    %cst_44 = arith.constant 5.000000e-01 : f32
    %112 = vector.broadcast %cst_44 : f32 to vector<8x128xf32>
    %113 = arith.mulf %112, %111 : vector<8x128xf32>
    %cst_45 = arith.constant 5.000000e-01 : f32
    %114 = vector.broadcast %cst_45 : f32 to vector<8x128xf32>
    %115 = arith.addf %113, %114 : vector<8x128xf32>
    %116 = vector.extract_strided_slice %93 {offsets = [0, 256], sizes = [8, 128], strides = [1, 1]} : vector<8x384xf32> to vector<8x128xf32>
    %117 = vector.extract_strided_slice %95 {offsets = [0, 256], sizes = [8, 128], strides = [1, 1]} : vector<8x384xf32> to vector<8x128xf32>
    %118 = arith.addf %117, %14 : vector<8x128xf32>
    %119 = arith.mulf %105, %118 : vector<8x128xf32>
    %120 = arith.addf %116, %119 : vector<8x128xf32>
    %121 = math.tanh %120 : vector<8x128xf32>
    %122 = arith.subf %87, %121 : vector<8x128xf32>
    %123 = arith.mulf %115, %122 : vector<8x128xf32>
    %124 = arith.addf %121, %123 : vector<8x128xf32>
    %125 = arith.index_cast %91 : i32 to index
    %c0_46 = arith.constant 0 : index
    %126 = vector.load %arg12[%125, %c0_46] : memref<64x128xf32, #tpu.memory_space<vmem>>, vector<8x128xf32>
    tpu.vector_store %arg12[%125, %c0_46], %124 {strides = array<i32>} : memref<64x128xf32, #tpu.memory_space<vmem>>, vector<8x128xf32>,
    %c3_i32 = arith.constant 3 : i32
    %c8_i32_47 = arith.constant 8 : i32
    %127 = arith.muli %c3_i32, %c8_i32_47 : i32
    %128 = tpu.assume_multiple %127, 8 : i32
    %129 = arith.index_cast %128 : i32 to index
    %c0_48 = arith.constant 0 : index
    %130 = vector.load %arg11[%129, %c0_48] : memref<64x384xf32, #tpu.memory_space<vmem>>, vector<8x384xf32>
    %c0_49 = arith.constant 0 : index
    %c0_50 = arith.constant 0 : index
    %131 = vector.load %arg5[%c0_49, %c0_50] : memref<128x384xf32, #tpu.memory_space<vmem>>, vector<128x384xf32>
    %cst_51 = arith.constant dense<0.000000e+00> : vector<8x384xf32>
    %132 = tpu.matmul %124, %131, %cst_51 {dimension_numbers = #tpu.dot_dimension_numbers<[1], [0], [0], [1], [0, 0, 1, 1], [], []>} : vector<8x128xf32>, vector<128x384xf32>, vector<8x384xf32> -> vector<8x384xf32>
    %133 = vector.extract_strided_slice %130 {offsets = [0, 0], sizes = [8, 128], strides = [1, 1]} : vector<8x384xf32> to vector<8x128xf32>
    %134 = vector.extract_strided_slice %132 {offsets = [0, 0], sizes = [8, 128], strides = [1, 1]} : vector<8x384xf32> to vector<8x128xf32>
    %135 = arith.addf %133, %134 : vector<8x128xf32>
    %cst_52 = arith.constant 5.000000e-01 : f32
    %136 = vector.broadcast %cst_52 : f32 to vector<8x128xf32>
    %137 = arith.mulf %136, %135 : vector<8x128xf32>
    %138 = math.tanh %137 : vector<8x128xf32>
    %cst_53 = arith.constant 5.000000e-01 : f32
    %139 = vector.broadcast %cst_53 : f32 to vector<8x128xf32>
    %140 = arith.mulf %139, %138 : vector<8x128xf32>
    %cst_54 = arith.constant 5.000000e-01 : f32
    %141 = vector.broadcast %cst_54 : f32 to vector<8x128xf32>
    %142 = arith.addf %140, %141 : vector<8x128xf32>
    %143 = vector.extract_strided_slice %130 {offsets = [0, 128], sizes = [8, 128], strides = [1, 1]} : vector<8x384xf32> to vector<8x128xf32>
    %144 = vector.extract_strided_slice %132 {offsets = [0, 128], sizes = [8, 128], strides = [1, 1]} : vector<8x384xf32> to vector<8x128xf32>
    %145 = arith.addf %143, %144 : vector<8x128xf32>
    %cst_55 = arith.constant 5.000000e-01 : f32
    %146 = vector.broadcast %cst_55 : f32 to vector<8x128xf32>
    %147 = arith.mulf %146, %145 : vector<8x128xf32>
    %148 = math.tanh %147 : vector<8x128xf32>
    %cst_56 = arith.constant 5.000000e-01 : f32
    %149 = vector.broadcast %cst_56 : f32 to vector<8x128xf32>
    %150 = arith.mulf %149, %148 : vector<8x128xf32>
    %cst_57 = arith.constant 5.000000e-01 : f32
    %151 = vector.broadcast %cst_57 : f32 to vector<8x128xf32>
    %152 = arith.addf %150, %151 : vector<8x128xf32>
    %153 = vector.extract_strided_slice %130 {offsets = [0, 256], sizes = [8, 128], strides = [1, 1]} : vector<8x384xf32> to vector<8x128xf32>
    %154 = vector.extract_strided_slice %132 {offsets = [0, 256], sizes = [8, 128], strides = [1, 1]} : vector<8x384xf32> to vector<8x128xf32>
    %155 = arith.addf %154, %14 : vector<8x128xf32>
    %156 = arith.mulf %142, %155 : vector<8x128xf32>
    %157 = arith.addf %153, %156 : vector<8x128xf32>
    %158 = math.tanh %157 : vector<8x128xf32>
    %159 = arith.subf %124, %158 : vector<8x128xf32>
    %160 = arith.mulf %152, %159 : vector<8x128xf32>
    %161 = arith.addf %158, %160 : vector<8x128xf32>
    %162 = arith.index_cast %128 : i32 to index
    %c0_58 = arith.constant 0 : index
    %163 = vector.load %arg12[%162, %c0_58] : memref<64x128xf32, #tpu.memory_space<vmem>>, vector<8x128xf32>
    tpu.vector_store %arg12[%162, %c0_58], %161 {strides = array<i32>} : memref<64x128xf32, #tpu.memory_space<vmem>>, vector<8x128xf32>,
    %c4_i32 = arith.constant 4 : i32
    %c8_i32_59 = arith.constant 8 : i32
    %164 = arith.muli %c4_i32, %c8_i32_59 : i32
    %165 = tpu.assume_multiple %164, 8 : i32
    %166 = arith.index_cast %165 : i32 to index
    %c0_60 = arith.constant 0 : index
    %167 = vector.load %arg11[%166, %c0_60] : memref<64x384xf32, #tpu.memory_space<vmem>>, vector<8x384xf32>
    %c0_61 = arith.constant 0 : index
    %c0_62 = arith.constant 0 : index
    %168 = vector.load %arg5[%c0_61, %c0_62] : memref<128x384xf32, #tpu.memory_space<vmem>>, vector<128x384xf32>
    %cst_63 = arith.constant dense<0.000000e+00> : vector<8x384xf32>
    %169 = tpu.matmul %161, %168, %cst_63 {dimension_numbers = #tpu.dot_dimension_numbers<[1], [0], [0], [1], [0, 0, 1, 1], [], []>} : vector<8x128xf32>, vector<128x384xf32>, vector<8x384xf32> -> vector<8x384xf32>
    %170 = vector.extract_strided_slice %167 {offsets = [0, 0], sizes = [8, 128], strides = [1, 1]} : vector<8x384xf32> to vector<8x128xf32>
    %171 = vector.extract_strided_slice %169 {offsets = [0, 0], sizes = [8, 128], strides = [1, 1]} : vector<8x384xf32> to vector<8x128xf32>
    %172 = arith.addf %170, %171 : vector<8x128xf32>
    %cst_64 = arith.constant 5.000000e-01 : f32
    %173 = vector.broadcast %cst_64 : f32 to vector<8x128xf32>
    %174 = arith.mulf %173, %172 : vector<8x128xf32>
    %175 = math.tanh %174 : vector<8x128xf32>
    %cst_65 = arith.constant 5.000000e-01 : f32
    %176 = vector.broadcast %cst_65 : f32 to vector<8x128xf32>
    %177 = arith.mulf %176, %175 : vector<8x128xf32>
    %cst_66 = arith.constant 5.000000e-01 : f32
    %178 = vector.broadcast %cst_66 : f32 to vector<8x128xf32>
    %179 = arith.addf %177, %178 : vector<8x128xf32>
    %180 = vector.extract_strided_slice %167 {offsets = [0, 128], sizes = [8, 128], strides = [1, 1]} : vector<8x384xf32> to vector<8x128xf32>
    %181 = vector.extract_strided_slice %169 {offsets = [0, 128], sizes = [8, 128], strides = [1, 1]} : vector<8x384xf32> to vector<8x128xf32>
    %182 = arith.addf %180, %181 : vector<8x128xf32>
    %cst_67 = arith.constant 5.000000e-01 : f32
    %183 = vector.broadcast %cst_67 : f32 to vector<8x128xf32>
    %184 = arith.mulf %183, %182 : vector<8x128xf32>
    %185 = math.tanh %184 : vector<8x128xf32>
    %cst_68 = arith.constant 5.000000e-01 : f32
    %186 = vector.broadcast %cst_68 : f32 to vector<8x128xf32>
    %187 = arith.mulf %186, %185 : vector<8x128xf32>
    %cst_69 = arith.constant 5.000000e-01 : f32
    %188 = vector.broadcast %cst_69 : f32 to vector<8x128xf32>
    %189 = arith.addf %187, %188 : vector<8x128xf32>
    %190 = vector.extract_strided_slice %167 {offsets = [0, 256], sizes = [8, 128], strides = [1, 1]} : vector<8x384xf32> to vector<8x128xf32>
    %191 = vector.extract_strided_slice %169 {offsets = [0, 256], sizes = [8, 128], strides = [1, 1]} : vector<8x384xf32> to vector<8x128xf32>
    %192 = arith.addf %191, %14 : vector<8x128xf32>
    %193 = arith.mulf %179, %192 : vector<8x128xf32>
    %194 = arith.addf %190, %193 : vector<8x128xf32>
    %195 = math.tanh %194 : vector<8x128xf32>
    %196 = arith.subf %161, %195 : vector<8x128xf32>
    %197 = arith.mulf %189, %196 : vector<8x128xf32>
    %198 = arith.addf %195, %197 : vector<8x128xf32>
    %199 = arith.index_cast %165 : i32 to index
    %c0_70 = arith.constant 0 : index
    %200 = vector.load %arg12[%199, %c0_70] : memref<64x128xf32, #tpu.memory_space<vmem>>, vector<8x128xf32>
    tpu.vector_store %arg12[%199, %c0_70], %198 {strides = array<i32>} : memref<64x128xf32, #tpu.memory_space<vmem>>, vector<8x128xf32>,
    %c5_i32 = arith.constant 5 : i32
    %c8_i32_71 = arith.constant 8 : i32
    %201 = arith.muli %c5_i32, %c8_i32_71 : i32
    %202 = tpu.assume_multiple %201, 8 : i32
    %203 = arith.index_cast %202 : i32 to index
    %c0_72 = arith.constant 0 : index
    %204 = vector.load %arg11[%203, %c0_72] : memref<64x384xf32, #tpu.memory_space<vmem>>, vector<8x384xf32>
    %c0_73 = arith.constant 0 : index
    %c0_74 = arith.constant 0 : index
    %205 = vector.load %arg5[%c0_73, %c0_74] : memref<128x384xf32, #tpu.memory_space<vmem>>, vector<128x384xf32>
    %cst_75 = arith.constant dense<0.000000e+00> : vector<8x384xf32>
    %206 = tpu.matmul %198, %205, %cst_75 {dimension_numbers = #tpu.dot_dimension_numbers<[1], [0], [0], [1], [0, 0, 1, 1], [], []>} : vector<8x128xf32>, vector<128x384xf32>, vector<8x384xf32> -> vector<8x384xf32>
    %207 = vector.extract_strided_slice %204 {offsets = [0, 0], sizes = [8, 128], strides = [1, 1]} : vector<8x384xf32> to vector<8x128xf32>
    %208 = vector.extract_strided_slice %206 {offsets = [0, 0], sizes = [8, 128], strides = [1, 1]} : vector<8x384xf32> to vector<8x128xf32>
    %209 = arith.addf %207, %208 : vector<8x128xf32>
    %cst_76 = arith.constant 5.000000e-01 : f32
    %210 = vector.broadcast %cst_76 : f32 to vector<8x128xf32>
    %211 = arith.mulf %210, %209 : vector<8x128xf32>
    %212 = math.tanh %211 : vector<8x128xf32>
    %cst_77 = arith.constant 5.000000e-01 : f32
    %213 = vector.broadcast %cst_77 : f32 to vector<8x128xf32>
    %214 = arith.mulf %213, %212 : vector<8x128xf32>
    %cst_78 = arith.constant 5.000000e-01 : f32
    %215 = vector.broadcast %cst_78 : f32 to vector<8x128xf32>
    %216 = arith.addf %214, %215 : vector<8x128xf32>
    %217 = vector.extract_strided_slice %204 {offsets = [0, 128], sizes = [8, 128], strides = [1, 1]} : vector<8x384xf32> to vector<8x128xf32>
    %218 = vector.extract_strided_slice %206 {offsets = [0, 128], sizes = [8, 128], strides = [1, 1]} : vector<8x384xf32> to vector<8x128xf32>
    %219 = arith.addf %217, %218 : vector<8x128xf32>
    %cst_79 = arith.constant 5.000000e-01 : f32
    %220 = vector.broadcast %cst_79 : f32 to vector<8x128xf32>
    %221 = arith.mulf %220, %219 : vector<8x128xf32>
    %222 = math.tanh %221 : vector<8x128xf32>
    %cst_80 = arith.constant 5.000000e-01 : f32
    %223 = vector.broadcast %cst_80 : f32 to vector<8x128xf32>
    %224 = arith.mulf %223, %222 : vector<8x128xf32>
    %cst_81 = arith.constant 5.000000e-01 : f32
    %225 = vector.broadcast %cst_81 : f32 to vector<8x128xf32>
    %226 = arith.addf %224, %225 : vector<8x128xf32>
    %227 = vector.extract_strided_slice %204 {offsets = [0, 256], sizes = [8, 128], strides = [1, 1]} : vector<8x384xf32> to vector<8x128xf32>
    %228 = vector.extract_strided_slice %206 {offsets = [0, 256], sizes = [8, 128], strides = [1, 1]} : vector<8x384xf32> to vector<8x128xf32>
    %229 = arith.addf %228, %14 : vector<8x128xf32>
    %230 = arith.mulf %216, %229 : vector<8x128xf32>
    %231 = arith.addf %227, %230 : vector<8x128xf32>
    %232 = math.tanh %231 : vector<8x128xf32>
    %233 = arith.subf %198, %232 : vector<8x128xf32>
    %234 = arith.mulf %226, %233 : vector<8x128xf32>
    %235 = arith.addf %232, %234 : vector<8x128xf32>
    %236 = arith.index_cast %202 : i32 to index
    %c0_82 = arith.constant 0 : index
    %237 = vector.load %arg12[%236, %c0_82] : memref<64x128xf32, #tpu.memory_space<vmem>>, vector<8x128xf32>
    tpu.vector_store %arg12[%236, %c0_82], %235 {strides = array<i32>} : memref<64x128xf32, #tpu.memory_space<vmem>>, vector<8x128xf32>,
    %c6_i32 = arith.constant 6 : i32
    %c8_i32_83 = arith.constant 8 : i32
    %238 = arith.muli %c6_i32, %c8_i32_83 : i32
    %239 = tpu.assume_multiple %238, 8 : i32
    %240 = arith.index_cast %239 : i32 to index
    %c0_84 = arith.constant 0 : index
    %241 = vector.load %arg11[%240, %c0_84] : memref<64x384xf32, #tpu.memory_space<vmem>>, vector<8x384xf32>
    %c0_85 = arith.constant 0 : index
    %c0_86 = arith.constant 0 : index
    %242 = vector.load %arg5[%c0_85, %c0_86] : memref<128x384xf32, #tpu.memory_space<vmem>>, vector<128x384xf32>
    %cst_87 = arith.constant dense<0.000000e+00> : vector<8x384xf32>
    %243 = tpu.matmul %235, %242, %cst_87 {dimension_numbers = #tpu.dot_dimension_numbers<[1], [0], [0], [1], [0, 0, 1, 1], [], []>} : vector<8x128xf32>, vector<128x384xf32>, vector<8x384xf32> -> vector<8x384xf32>
    %244 = vector.extract_strided_slice %241 {offsets = [0, 0], sizes = [8, 128], strides = [1, 1]} : vector<8x384xf32> to vector<8x128xf32>
    %245 = vector.extract_strided_slice %243 {offsets = [0, 0], sizes = [8, 128], strides = [1, 1]} : vector<8x384xf32> to vector<8x128xf32>
    %246 = arith.addf %244, %245 : vector<8x128xf32>
    %cst_88 = arith.constant 5.000000e-01 : f32
    %247 = vector.broadcast %cst_88 : f32 to vector<8x128xf32>
    %248 = arith.mulf %247, %246 : vector<8x128xf32>
    %249 = math.tanh %248 : vector<8x128xf32>
    %cst_89 = arith.constant 5.000000e-01 : f32
    %250 = vector.broadcast %cst_89 : f32 to vector<8x128xf32>
    %251 = arith.mulf %250, %249 : vector<8x128xf32>
    %cst_90 = arith.constant 5.000000e-01 : f32
    %252 = vector.broadcast %cst_90 : f32 to vector<8x128xf32>
    %253 = arith.addf %251, %252 : vector<8x128xf32>
    %254 = vector.extract_strided_slice %241 {offsets = [0, 128], sizes = [8, 128], strides = [1, 1]} : vector<8x384xf32> to vector<8x128xf32>
    %255 = vector.extract_strided_slice %243 {offsets = [0, 128], sizes = [8, 128], strides = [1, 1]} : vector<8x384xf32> to vector<8x128xf32>
    %256 = arith.addf %254, %255 : vector<8x128xf32>
    %cst_91 = arith.constant 5.000000e-01 : f32
    %257 = vector.broadcast %cst_91 : f32 to vector<8x128xf32>
    %258 = arith.mulf %257, %256 : vector<8x128xf32>
    %259 = math.tanh %258 : vector<8x128xf32>
    %cst_92 = arith.constant 5.000000e-01 : f32
    %260 = vector.broadcast %cst_92 : f32 to vector<8x128xf32>
    %261 = arith.mulf %260, %259 : vector<8x128xf32>
    %cst_93 = arith.constant 5.000000e-01 : f32
    %262 = vector.broadcast %cst_93 : f32 to vector<8x128xf32>
    %263 = arith.addf %261, %262 : vector<8x128xf32>
    %264 = vector.extract_strided_slice %241 {offsets = [0, 256], sizes = [8, 128], strides = [1, 1]} : vector<8x384xf32> to vector<8x128xf32>
    %265 = vector.extract_strided_slice %243 {offsets = [0, 256], sizes = [8, 128], strides = [1, 1]} : vector<8x384xf32> to vector<8x128xf32>
    %266 = arith.addf %265, %14 : vector<8x128xf32>
    %267 = arith.mulf %253, %266 : vector<8x128xf32>
    %268 = arith.addf %264, %267 : vector<8x128xf32>
    %269 = math.tanh %268 : vector<8x128xf32>
    %270 = arith.subf %235, %269 : vector<8x128xf32>
    %271 = arith.mulf %263, %270 : vector<8x128xf32>
    %272 = arith.addf %269, %271 : vector<8x128xf32>
    %273 = arith.index_cast %239 : i32 to index
    %c0_94 = arith.constant 0 : index
    %274 = vector.load %arg12[%273, %c0_94] : memref<64x128xf32, #tpu.memory_space<vmem>>, vector<8x128xf32>
    tpu.vector_store %arg12[%273, %c0_94], %272 {strides = array<i32>} : memref<64x128xf32, #tpu.memory_space<vmem>>, vector<8x128xf32>,
    %c7_i32 = arith.constant 7 : i32
    %c8_i32_95 = arith.constant 8 : i32
    %275 = arith.muli %c7_i32, %c8_i32_95 : i32
    %276 = tpu.assume_multiple %275, 8 : i32
    %277 = arith.index_cast %276 : i32 to index
    %c0_96 = arith.constant 0 : index
    %278 = vector.load %arg11[%277, %c0_96] : memref<64x384xf32, #tpu.memory_space<vmem>>, vector<8x384xf32>
    %c0_97 = arith.constant 0 : index
    %c0_98 = arith.constant 0 : index
    %279 = vector.load %arg5[%c0_97, %c0_98] : memref<128x384xf32, #tpu.memory_space<vmem>>, vector<128x384xf32>
    %cst_99 = arith.constant dense<0.000000e+00> : vector<8x384xf32>
    %280 = tpu.matmul %272, %279, %cst_99 {dimension_numbers = #tpu.dot_dimension_numbers<[1], [0], [0], [1], [0, 0, 1, 1], [], []>} : vector<8x128xf32>, vector<128x384xf32>, vector<8x384xf32> -> vector<8x384xf32>
    %281 = vector.extract_strided_slice %278 {offsets = [0, 0], sizes = [8, 128], strides = [1, 1]} : vector<8x384xf32> to vector<8x128xf32>
    %282 = vector.extract_strided_slice %280 {offsets = [0, 0], sizes = [8, 128], strides = [1, 1]} : vector<8x384xf32> to vector<8x128xf32>
    %283 = arith.addf %281, %282 : vector<8x128xf32>
    %cst_100 = arith.constant 5.000000e-01 : f32
    %284 = vector.broadcast %cst_100 : f32 to vector<8x128xf32>
    %285 = arith.mulf %284, %283 : vector<8x128xf32>
    %286 = math.tanh %285 : vector<8x128xf32>
    %cst_101 = arith.constant 5.000000e-01 : f32
    %287 = vector.broadcast %cst_101 : f32 to vector<8x128xf32>
    %288 = arith.mulf %287, %286 : vector<8x128xf32>
    %cst_102 = arith.constant 5.000000e-01 : f32
    %289 = vector.broadcast %cst_102 : f32 to vector<8x128xf32>
    %290 = arith.addf %288, %289 : vector<8x128xf32>
    %291 = vector.extract_strided_slice %278 {offsets = [0, 128], sizes = [8, 128], strides = [1, 1]} : vector<8x384xf32> to vector<8x128xf32>
    %292 = vector.extract_strided_slice %280 {offsets = [0, 128], sizes = [8, 128], strides = [1, 1]} : vector<8x384xf32> to vector<8x128xf32>
    %293 = arith.addf %291, %292 : vector<8x128xf32>
    %cst_103 = arith.constant 5.000000e-01 : f32
    %294 = vector.broadcast %cst_103 : f32 to vector<8x128xf32>
    %295 = arith.mulf %294, %293 : vector<8x128xf32>
    %296 = math.tanh %295 : vector<8x128xf32>
    %cst_104 = arith.constant 5.000000e-01 : f32
    %297 = vector.broadcast %cst_104 : f32 to vector<8x128xf32>
    %298 = arith.mulf %297, %296 : vector<8x128xf32>
    %cst_105 = arith.constant 5.000000e-01 : f32
    %299 = vector.broadcast %cst_105 : f32 to vector<8x128xf32>
    %300 = arith.addf %298, %299 : vector<8x128xf32>
    %301 = vector.extract_strided_slice %278 {offsets = [0, 256], sizes = [8, 128], strides = [1, 1]} : vector<8x384xf32> to vector<8x128xf32>
    %302 = vector.extract_strided_slice %280 {offsets = [0, 256], sizes = [8, 128], strides = [1, 1]} : vector<8x384xf32> to vector<8x128xf32>
    %303 = arith.addf %302, %14 : vector<8x128xf32>
    %304 = arith.mulf %290, %303 : vector<8x128xf32>
    %305 = arith.addf %301, %304 : vector<8x128xf32>
    %306 = math.tanh %305 : vector<8x128xf32>
    %307 = arith.subf %272, %306 : vector<8x128xf32>
    %308 = arith.mulf %300, %307 : vector<8x128xf32>
    %309 = arith.addf %306, %308 : vector<8x128xf32>
    %310 = arith.index_cast %276 : i32 to index
    %c0_106 = arith.constant 0 : index
    %311 = vector.load %arg12[%310, %c0_106] : memref<64x128xf32, #tpu.memory_space<vmem>>, vector<8x128xf32>
    tpu.vector_store %arg12[%310, %c0_106], %309 {strides = array<i32>} : memref<64x128xf32, #tpu.memory_space<vmem>>, vector<8x128xf32>,
    %c8_i32_107 = arith.constant 8 : i32
    %c0_108 = arith.constant 0 : index
    %c0_109 = arith.constant 0 : index
    %312 = vector.load %arg10[%c0_108, %c0_109] : memref<8x128xf32, #tpu.memory_space<vmem>>, vector<8x128xf32>
    tpu.vector_store %arg10[%c0_108, %c0_109], %309 {strides = array<i32>} : memref<8x128xf32, #tpu.memory_space<vmem>>, vector<8x128xf32>,
    %c0_110 = arith.constant 0 : index
    %c0_111 = arith.constant 0 : index
    %313 = vector.load %arg12[%c0_110, %c0_111] : memref<64x128xf32, #tpu.memory_space<vmem>>, vector<64x128xf32>
    %c0_112 = arith.constant 0 : index
    %c0_113 = arith.constant 0 : index
    %314 = vector.load %arg7[%c0_112, %c0_113] : memref<128x128xf32, #tpu.memory_space<vmem>>, vector<128x128xf32>
    %cst_114 = arith.constant dense<0.000000e+00> : vector<64x128xf32>
    %315 = tpu.matmul %313, %314, %cst_114 {dimension_numbers = #tpu.dot_dimension_numbers<[1], [0], [0], [1], [0, 0, 1, 1], [], []>} : vector<64x128xf32>, vector<128x128xf32>, vector<64x128xf32> -> vector<64x128xf32>
    %c0_115 = arith.constant 0 : index
    %c0_116 = arith.constant 0 : index
    %316 = vector.load %arg8[%c0_115, %c0_116] : memref<1x128xf32, #tpu.memory_space<vmem>>, vector<1x128xf32>
    %317 = vector.broadcast %316 : vector<1x128xf32> to vector<64x128xf32>
    %318 = arith.addf %315, %317 : vector<64x128xf32>
    %c0_117 = arith.constant 0 : index
    %c0_118 = arith.constant 0 : index
    %319 = vector.load %arg9[%c0_117, %c0_118] : memref<64x128xf32, #tpu.memory_space<vmem>>, vector<64x128xf32>
    tpu.vector_store %arg9[%c0_117, %c0_118], %318 {strides = array<i32>} : memref<64x128xf32, #tpu.memory_space<vmem>>, vector<64x128xf32>,
    return
  }
  func.func @transform_0(%arg0: i32) -> (i32, i32) {
    %c0_i32 = arith.constant 0 : i32
    %c0_i32_0 = arith.constant 0 : i32
    return %arg0, %c0_i32 : i32, i32
  }
  func.func @transform_1(%arg0: i32) -> (i32, i32) {
    %c0_i32 = arith.constant 0 : i32
    %c0_i32_0 = arith.constant 0 : i32
    %c0_i32_1 = arith.constant 0 : i32
    return %c0_i32, %c0_i32_0 : i32, i32
  }
  func.func @transform_2(%arg0: i32) -> (i32, i32) {
    %c0_i32 = arith.constant 0 : i32
    %c0_i32_0 = arith.constant 0 : i32
    %c0_i32_1 = arith.constant 0 : i32
    return %c0_i32, %c0_i32_0 : i32, i32
  }
  func.func @transform_3(%arg0: i32) -> (i32, i32) {
    %c0_i32 = arith.constant 0 : i32
    %c0_i32_0 = arith.constant 0 : i32
    %c0_i32_1 = arith.constant 0 : i32
    return %c0_i32, %c0_i32_0 : i32, i32
  }
  func.func @transform_4(%arg0: i32) -> (i32, i32) {
    %c0_i32 = arith.constant 0 : i32
    %c0_i32_0 = arith.constant 0 : i32
    %c0_i32_1 = arith.constant 0 : i32
    return %c0_i32, %c0_i32_0 : i32, i32
  }
  func.func @transform_5(%arg0: i32) -> (i32, i32) {
    %c0_i32 = arith.constant 0 : i32
    %c0_i32_0 = arith.constant 0 : i32
    %c0_i32_1 = arith.constant 0 : i32
    return %c0_i32, %c0_i32_0 : i32, i32
  }
  func.func @transform_6(%arg0: i32) -> (i32, i32) {
    %c0_i32 = arith.constant 0 : i32
    %c0_i32_0 = arith.constant 0 : i32
    %c0_i32_1 = arith.constant 0 : i32
    return %c0_i32, %c0_i32_0 : i32, i32
  }
  func.func @transform_7(%arg0: i32) -> (i32, i32) {
    %c0_i32 = arith.constant 0 : i32
    %c0_i32_0 = arith.constant 0 : i32
    %c0_i32_1 = arith.constant 0 : i32
    return %c0_i32, %c0_i32_0 : i32, i32
  }
  func.func @transform_8(%arg0: i32) -> (i32, i32) {
    %c0_i32 = arith.constant 0 : i32
    %c0_i32_0 = arith.constant 0 : i32
    return %arg0, %c0_i32 : i32, i32
  }
  func.func @transform_9(%arg0: i32) -> (i32, i32) {
    %c0_i32 = arith.constant 0 : i32
    %c0_i32_0 = arith.constant 0 : i32
    %c0_i32_1 = arith.constant 0 : i32
    return %c0_i32, %c0_i32_0 : i32, i32
  }
}

</mosaic_0001>

<llo_original>
// kernel: tpu_custom_call.1
$region0: #{tpu_custom_call.1}
  #allocation0 [shape = 'u32[]', space=smem, size = 0x4, offset = 0x4, fixed_abs, tag = 'smem constant byte address 0x4 - core index']
  #allocation1 [shape = 'u32[72,128]{1,0:T(1,128)}', space=vmem, size = 0x9000, scoped, tag = 'internal scratch']
  #allocation2 [shape = 'f32[64,384]{1,0:T(8,128)}', space=vmem, size = 0x18000, scoped, tag = 'scratch operand']
  #allocation3 [shape = 'f32[64,128]{1,0:T(8,128)}', space=vmem, size = 0x8000, scoped, tag = 'scratch operand']
  %s0 = inlined_call_operand.vmem [shape: f32[64,1], index: 0, kind: input, shape index: {}]
  %s1 = inlined_call_operand.vmem [shape: f32[8,128], index: 1, kind: input, shape index: {}]
  %s2 = inlined_call_operand.vmem [shape: f32[1,384], index: 2, kind: input, shape index: {}]
  %s3 = inlined_call_operand.vmem [shape: f32[1,384], index: 3, kind: input, shape index: {}]
  %s4 = inlined_call_operand.hbm [shape: f32[128,384], index: 4, kind: input, shape index: {}]
  %s5 = inlined_call_operand.vmem [shape: f32[1,128], index: 5, kind: input, shape index: {}]
  %s6 = inlined_call_operand.hbm [shape: f32[128,128], index: 6, kind: input, shape index: {}]
  %s7 = inlined_call_operand.vmem [shape: f32[1,128], index: 7, kind: input, shape index: {}]
  %s8 = inlined_call_operand.hbm [shape: f32[64,128], index: 8, kind: output, shape index: {0}]
  %s9 = inlined_call_operand.hbm [shape: f32[8,128], index: 9, kind: output, shape index: {1}]
  %10 = xla_tuple %s8, %s9
  %s11 = sld [smem:[#allocation0]]
  $region62: #{tpu_custom_call.1} parent=0
    _
  %s13 = ssub.s32 1, %s11
  %s14 = scalar_select 0, %s13, %s11
  $region1: #{tpu_custom_call.1} parent=0
    #allocation4 [shape = 'u8[196608]{0}', space=vmem, size = 0x30000, scoped, tag = 'input window, operand 4, single buffered']
    #allocation5 [shape = 's32[1]{0}', space=sflag, size = 0x4, scoped, tag = 'scoped memory for tpu_custom_call.1']
    #allocation6 [shape = 's32[1]{0}', space=sflag, size = 0x4, scoped, tag = 'scoped memory for tpu_custom_call.1']
    #allocation7 [shape = 'u8[65536]{0}', space=vmem, size = 0x10000, scoped, tag = 'input window, operand 6, single buffered']
    #allocation8 [shape = 's32[1]{0}', space=sflag, size = 0x4, scoped, tag = 'scoped memory for tpu_custom_call.1']
    #allocation9 [shape = 'u8[32768]{0}', space=vmem, size = 0x8000, scoped, tag = 'output window, operand 0, single buffered']
    #allocation10 [shape = 'u8[4096]{0}', space=vmem, size = 0x1000, scoped, tag = 'output window, operand 1, single buffered']
    #allocation11 [shape = 's32[1]{0}', space=sflag, size = 0x4, scoped, tag = 'scoped memory for tpu_custom_call.1']
    %15 = vsyncpa [#allocation5], 0
    %16 = vsyncpa [#allocation8], 0
    %17 = vsyncpa [#allocation6], 0
    %18 = vsyncpa [#allocation11], 0
    // Predicated region
    $region2: #{tpu_custom_call.1} parent=1 // pred_check
      _
    $region3: #{tpu_custom_call.1} parent=1 // pred_check_branch
      %20 = sbr.rel (0) target = $region5
    $region4: #{tpu_custom_call.1} parent=1 // pred_region
      _
    $region5: #{tpu_custom_call.1} parent=1 // pred_fallthru
      _
    // Predicated region
    $region6: #{tpu_custom_call.1} parent=1 // pred_check
      _
    $region7: #{tpu_custom_call.1} parent=1 // pred_check_branch
      %22 = sbr.rel (0) target = $region9
    $region8: #{tpu_custom_call.1} parent=1 // pred_region
      _
    $region9: #{tpu_custom_call.1} parent=1 // pred_fallthru
      _
    // Predicated region
    $region10: #{tpu_custom_call.1} parent=1 // pred_check
      _
    $region11: #{tpu_custom_call.1} parent=1 // pred_check_branch
      %24 = sbr.rel (0) target = $region13
    $region12: #{tpu_custom_call.1} parent=1 // pred_region
      _
    $region13: #{tpu_custom_call.1} parent=1 // pred_fallthru
      _
    // Predicated region
    $region14: #{tpu_custom_call.1} parent=1 // pred_check
      _
    $region15: #{tpu_custom_call.1} parent=1 // pred_check_branch
      %26 = sbr.rel (0) target = $region17
    $region16: #{tpu_custom_call.1} parent=1 // pred_region
      _
    $region17: #{tpu_custom_call.1} parent=1 // pred_fallthru
      _
    // Predicated region
    $region18: #{tpu_custom_call.1} parent=1 // pred_check
      _
    $region19: #{tpu_custom_call.1} parent=1 // pred_check_branch
      %28 = sbr.rel (0) target = $region21
    $region20: #{tpu_custom_call.1} parent=1 // pred_region
      %30 = vsyncadd [#allocation5], 0
      %s31 = sshll.u32 %s4, 4
      %s32 = int_to_ptr.hbm [resolvable:$true] %s31
      %s33 = sshll.u32 [#allocation4], 4
      %s34 = int_to_ptr.vmem [resolvable:$true] %s33
      %39 = dma.hbm_to_vmem [thread:$0]  %s32, 6144, %s34, [#allocation5], 384, 384, 24
    $region21: #{tpu_custom_call.1} parent=1 // pred_fallthru
      _
    // Predicated region
    $region22: #{tpu_custom_call.1} parent=1 // pred_check
      _
    $region23: #{tpu_custom_call.1} parent=1 // pred_check_branch
      %41 = sbr.rel (0) target = $region25
    $region24: #{tpu_custom_call.1} parent=1 // pred_region
      _
    $region25: #{tpu_custom_call.1} parent=1 // pred_fallthru
      _
    // Predicated region
    $region26: #{tpu_custom_call.1} parent=1 // pred_check
      _
    $region27: #{tpu_custom_call.1} parent=1 // pred_check_branch
      %43 = sbr.rel (0) target = $region29
    $region28: #{tpu_custom_call.1} parent=1 // pred_region
      %45 = vsyncadd [#allocation8], 0
      %s46 = sshll.u32 %s6, 4
      %s47 = int_to_ptr.hbm [resolvable:$true] %s46
      %s48 = sshll.u32 [#allocation7], 4
      %s49 = int_to_ptr.vmem [resolvable:$true] %s48
      %54 = dma.hbm_to_vmem [thread:$0]  %s47, 2048, %s49, [#allocation8], 128, 128, 8
    $region29: #{tpu_custom_call.1} parent=1 // pred_fallthru
      _
    // Predicated region
    $region30: #{tpu_custom_call.1} parent=1 // pred_check
      _
    $region31: #{tpu_custom_call.1} parent=1 // pred_check_branch
      %56 = sbr.rel (0) target = $region33
    $region32: #{tpu_custom_call.1} parent=1 // pred_region
      _
    $region33: #{tpu_custom_call.1} parent=1 // pred_fallthru
      _
    // Predicated region
    $region34: #{tpu_custom_call.1} parent=1 // pred_check
      _
    $region35: #{tpu_custom_call.1} parent=1 // pred_check_branch
      %58 = sbr.rel (0) target = $region37
    $region36: #{tpu_custom_call.1} parent=1 // pred_region
      %60 = dma.done [#allocation5], 6144
    $region37: #{tpu_custom_call.1} parent=1 // pred_fallthru
      _
    // Predicated region
    $region38: #{tpu_custom_call.1} parent=1 // pred_check
      _
    $region39: #{tpu_custom_call.1} parent=1 // pred_check_branch
      %62 = sbr.rel (0) target = $region41
    $region40: #{tpu_custom_call.1} parent=1 // pred_region
      %64 = dma.done [#allocation8], 2048
    $region41: #{tpu_custom_call.1} parent=1 // pred_fallthru
      _
    %p65 = scmp.eq.s32.totalorder 0, 0
    // Predicated region
    $region42: #{tpu_custom_call.1} parent=1 // pred_check
      %p66 = pneg %p65
    $region43: #{tpu_custom_call.1} parent=1 // pred_check_branch
      %68 = sbr.rel (%p66) target = $region45
    $region44: #{tpu_custom_call.1} parent=1 // pred_region
      %v69 = vld [vmem:[%s1] sm:$0xff]
      %70 = vst [vmem:[#allocation10] sm:$0xff] %v69
    $region45: #{tpu_custom_call.1} parent=1 // pred_fallthru
      _
    %v71 = vld [vmem:[%s0] sm:$0xff]
    %v72 = vld [vmem:[%s0 + $0x8] sm:$0xff]
    %v73 = vld [vmem:[%s0 + $0x10] sm:$0xff]
    %v74 = vld [vmem:[%s0 + $0x18] sm:$0xff]
    %v75 = vld [vmem:[%s0 + $0x20] sm:$0xff]
    %v76 = vld [vmem:[%s0 + $0x28] sm:$0xff]
    %v77 = vld [vmem:[%s0 + $0x30] sm:$0xff]
    %v78 = vld [vmem:[%s0 + $0x38] sm:$0xff]
    %v79 = vld [vmem:[%s2] sm:$0x7]
    %81 = vset.pattern.permute.xlu0 0
    %82 = vperm.xlu0 %81, %v71
    %v83 = vpop.permute.xlu0 %82
    %86 = vset.pattern.permute.xlu0 0
    %87 = vperm.xlu0 %86, %v72
    %v88 = vpop.permute.xlu0 %87
    %91 = vset.pattern.permute.xlu0 0
    %92 = vperm.xlu0 %91, %v73
    %v93 = vpop.permute.xlu0 %92
    %96 = vset.pattern.permute.xlu0 0
    %97 = vperm.xlu0 %96, %v74
    %v98 = vpop.permute.xlu0 %97
    %101 = vset.pattern.permute.xlu0 0
    %102 = vperm.xlu0 %101, %v75
    %v103 = vpop.permute.xlu0 %102
    %106 = vset.pattern.permute.xlu0 0
    %107 = vperm.xlu0 %106, %v76
    %v108 = vpop.permute.xlu0 %107
    %111 = vset.pattern.permute.xlu0 0
    %112 = vperm.xlu0 %111, %v77
    %v113 = vpop.permute.xlu0 %112
    %116 = vset.pattern.permute.xlu0 0
    %117 = vperm.xlu0 %116, %v78
    %v118 = vpop.permute.xlu0 %117
    %v121 = vperm.slane %v79, 0
    %v122 = vperm.slane %v79, 1
    %v123 = vperm.slane %v79, 2
    %v127 = vmul.f32 %v83, %v121
    %v128 = vmul.f32 %v83, %v122
    %v129 = vmul.f32 %v83, %v123
    %v130 = vmul.f32 %v88, %v121
    %v131 = vmul.f32 %v88, %v122
    %v132 = vmul.f32 %v88, %v123
    %v133 = vmul.f32 %v93, %v121
    %v134 = vmul.f32 %v93, %v122
    %v135 = vmul.f32 %v93, %v123
    %v136 = vmul.f32 %v98, %v121
    %v137 = vmul.f32 %v98, %v122
    %v138 = vmul.f32 %v98, %v123
    %v139 = vmul.f32 %v103, %v121
    %v140 = vmul.f32 %v103, %v122
    %v141 = vmul.f32 %v103, %v123
    %v142 = vmul.f32 %v108, %v121
    %v143 = vmul.f32 %v108, %v122
    %v144 = vmul.f32 %v108, %v123
    %v145 = vmul.f32 %v113, %v121
    %v146 = vmul.f32 %v113, %v122
    %v147 = vmul.f32 %v113, %v123
    %v148 = vmul.f32 %v118, %v121
    %v149 = vmul.f32 %v118, %v122
    %v150 = vmul.f32 %v118, %v123
    %v151 = vld [vmem:[%s3] sm:$0x7]
    %v153 = vperm.slane %v151, 0
    %v154 = vperm.slane %v151, 1
    %v155 = vperm.slane %v151, 2
    %v159 = vadd.f32 %v127, %v153
    %v160 = vadd.f32 %v128, %v154
    %v161 = vadd.f32 %v129, %v155
    %v162 = vadd.f32 %v130, %v153
    %v163 = vadd.f32 %v131, %v154
    %v164 = vadd.f32 %v132, %v155
    %v165 = vadd.f32 %v133, %v153
    %v166 = vadd.f32 %v134, %v154
    %v167 = vadd.f32 %v135, %v155
    %v168 = vadd.f32 %v136, %v153
    %v169 = vadd.f32 %v137, %v154
    %v170 = vadd.f32 %v138, %v155
    %v171 = vadd.f32 %v139, %v153
    %v172 = vadd.f32 %v140, %v154
    %v173 = vadd.f32 %v141, %v155
    %v174 = vadd.f32 %v142, %v153
    %v175 = vadd.f32 %v143, %v154
    %v176 = vadd.f32 %v144, %v155
    %v177 = vadd.f32 %v145, %v153
    %v178 = vadd.f32 %v146, %v154
    %v179 = vadd.f32 %v147, %v155
    %v180 = vadd.f32 %v148, %v153
    %v181 = vadd.f32 %v149, %v154
    %v182 = vadd.f32 %v150, %v155
    %183 = vst [vmem:[#allocation2] sm:$0xff] %v159
    %184 = vst [vmem:[#allocation2 + $0x8] sm:$0xff] %v160
    %185 = vst [vmem:[#allocation2 + $0x10] sm:$0xff] %v161
    %186 = vst [vmem:[#allocation2 + $0x18] sm:$0xff] %v162
    %187 = vst [vmem:[#allocation2 + $0x20] sm:$0xff] %v163
    %188 = vst [vmem:[#allocation2 + $0x28] sm:$0xff] %v164
    %189 = vst [vmem:[#allocation2 + $0x30] sm:$0xff] %v165
    %190 = vst [vmem:[#allocation2 + $0x38] sm:$0xff] %v166
    %191 = vst [vmem:[#allocation2 + $0x40] sm:$0xff] %v167
    %192 = vst [vmem:[#allocation2 + $0x48] sm:$0xff] %v168
    %193 = vst [vmem:[#allocation2 + $0x50] sm:$0xff] %v169
    %194 = vst [vmem:[#allocation2 + $0x58] sm:$0xff] %v170
    %195 = vst [vmem:[#allocation2 + $0x60] sm:$0xff] %v171
    %196 = vst [vmem:[#allocation2 + $0x68] sm:$0xff] %v172
    %197 = vst [vmem:[#allocation2 + $0x70] sm:$0xff] %v173
    %198 = vst [vmem:[#allocation2 + $0x78] sm:$0xff] %v174
    %199 = vst [vmem:[#allocation2 + $0x80] sm:$0xff] %v175
    %200 = vst [vmem:[#allocation2 + $0x88] sm:$0xff] %v176
    %201 = vst [vmem:[#allocation2 + $0x90] sm:$0xff] %v177
    %202 = vst [vmem:[#allocation2 + $0x98] sm:$0xff] %v178
    %203 = vst [vmem:[#allocation2 + $0xa0] sm:$0xff] %v179
    %204 = vst [vmem:[#allocation2 + $0xa8] sm:$0xff] %v180
    %205 = vst [vmem:[#allocation2 + $0xb0] sm:$0xff] %v181
    %206 = vst [vmem:[#allocation2 + $0xb8] sm:$0xff] %v182
    %v207 = vld [vmem:[%s5] sm:$0x1]
    %v209 = vperm.slane %v207, 0
    %v211 = vld [vmem:[#allocation10] sm:$0xff]
    %s212 = smul.u32 0, 3
    %s213 = smul.addr %s212, 8
    %s214 = scalar_lea.vmem [#allocation2], %s213
    %v215 = vld [vmem:[%s214] sm:$0xff]
    %v216 = vld [vmem:[%s214 + $0x8] sm:$0xff]
    %v217 = vld [vmem:[%s214 + $0x10] sm:$0xff]
    %v218 = vld [vmem:[#allocation4] sm:$0xff]
    %v219 = vld [vmem:[#allocation4 + $0x8] sm:$0xff]
    %v220 = vld [vmem:[#allocation4 + $0x10] sm:$0xff]
    %v221 = vld [vmem:[#allocation4 + $0x18] sm:$0xff]
    %v222 = vld [vmem:[#allocation4 + $0x20] sm:$0xff]
    %v223 = vld [vmem:[#allocation4 + $0x28] sm:$0xff]
    %v224 = vld [vmem:[#allocation4 + $0x30] sm:$0xff]
    %v225 = vld [vmem:[#allocation4 + $0x38] sm:$0xff]
    %v226 = vld [vmem:[#allocation4 + $0x40] sm:$0xff]
    %v227 = vld [vmem:[#allocation4 + $0x48] sm:$0xff]
    %v228 = vld [vmem:[#allocation4 + $0x50] sm:$0xff]
    %v229 = vld [vmem:[#allocation4 + $0x58] sm:$0xff]
    %v230 = vld [vmem:[#allocation4 + $0x60] sm:$0xff]
    %v231 = vld [vmem:[#allocation4 + $0x68] sm:$0xff]
    %v232 = vld [vmem:[#allocation4 + $0x70] sm:$0xff]
    %v233 = vld [vmem:[#allocation4 + $0x78] sm:$0xff]
    %v234 = vld [vmem:[#allocation4 + $0x80] sm:$0xff]
    %v235 = vld [vmem:[#allocation4 + $0x88] sm:$0xff]
    %v236 = vld [vmem:[#allocation4 + $0x90] sm:$0xff]
    %v237 = vld [vmem:[#allocation4 + $0x98] sm:$0xff]
    %v238 = vld [vmem:[#allocation4 + $0xa0] sm:$0xff]
    %v239 = vld [vmem:[#allocation4 + $0xa8] sm:$0xff]
    %v240 = vld [vmem:[#allocation4 + $0xb0] sm:$0xff]
    %v241 = vld [vmem:[#allocation4 + $0xb8] sm:$0xff]
    %v242 = vld [vmem:[#allocation4 + $0xc0] sm:$0xff]
    %v243 = vld [vmem:[#allocation4 + $0xc8] sm:$0xff]
    %v244 = vld [vmem:[#allocation4 + $0xd0] sm:$0xff]
    %v245 = vld [vmem:[#allocation4 + $0xd8] sm:$0xff]
    %v246 = vld [vmem:[#allocation4 + $0xe0] sm:$0xff]
    %v247 = vld [vmem:[#allocation4 + $0xe8] sm:$0xff]
    %v248 = vld [vmem:[#allocation4 + $0xf0] sm:$0xff]
    %v249 = vld [vmem:[#allocation4 + $0xf8] sm:$0xff]
    %v250 = vld [vmem:[#allocation4 + $0x100] sm:$0xff]
    %v251 = vld [vmem:[#allocation4 + $0x108] sm:$0xff]
    %v252 = vld [vmem:[#allocation4 + $0x110] sm:$0xff]
    %v253 = vld [vmem:[#allocation4 + $0x118] sm:$0xff]
    %v254 = vld [vmem:[#allocation4 + $0x120] sm:$0xff]
    %v255 = vld [vmem:[#allocation4 + $0x128] sm:$0xff]
    %v256 = vld [vmem:[#allocation4 + $0x130] sm:$0xff]
    %v257 = vld [vmem:[#allocation4 + $0x138] sm:$0xff]
    %v258 = vld [vmem:[#allocation4 + $0x140] sm:$0xff]
    %v259 = vld [vmem:[#allocation4 + $0x148] sm:$0xff]
    %v260 = vld [vmem:[#allocation4 + $0x150] sm:$0xff]
    %v261 = vld [vmem:[#allocation4 + $0x158] sm:$0xff]
    %v262 = vld [vmem:[#allocation4 + $0x160] sm:$0xff]
    %v263 = vld [vmem:[#allocation4 + $0x168] sm:$0xff]
    %v264 = vld [vmem:[#allocation4 + $0x170] sm:$0xff]
    %v265 = vld [vmem:[#allocation4 + $0x178] sm:$0xff]
    %266 = vmatpush.msra.mxu0 %v263
    %267 = vmatpush.msra.mxu0 %v260
    %268 = vmatpush.msra.mxu0 %v257
    %269 = vmatpush.msra.mxu0 %v254
    %270 = vmatpush.msra.mxu0 %v251
    %271 = vmatpush.msra.mxu0 %v248
    %272 = vmatpush.msra.mxu0 %v245
    %273 = vmatpush.msra.mxu0 %v242
    %274 = vmatpush.msra.mxu0 %v239
    %275 = vmatpush.msra.mxu0 %v236
    %276 = vmatpush.msra.mxu0 %v233
    %277 = vmatpush.msra.mxu0 %v230
    %278 = vmatpush.msra.mxu0 %v227
    %279 = vmatpush.msra.mxu0 %v224
    %280 = vmatpush.msra.mxu0 %v221
    %281 = vmatpush.msra.mxu0 %v218
    %282 = vmatmul.f32.gmra.mxu0 %v211
    %v283 = vpop.f32.mrf.mxu0
    %v284 = vadd.f32 0.0, %v283
    %285 = vdwg.mxu0
    %286 = vmatpush.msra.mxu0 %v264
    %287 = vmatpush.msra.mxu0 %v261
    %288 = vmatpush.msra.mxu0 %v258
    %289 = vmatpush.msra.mxu0 %v255
    %290 = vmatpush.msra.mxu0 %v252
    %291 = vmatpush.msra.mxu0 %v249
    %292 = vmatpush.msra.mxu0 %v246
    %293 = vmatpush.msra.mxu0 %v243
    %294 = vmatpush.msra.mxu0 %v240
    %295 = vmatpush.msra.mxu0 %v237
    %296 = vmatpush.msra.mxu0 %v234
    %297 = vmatpush.msra.mxu0 %v231
    %298 = vmatpush.msra.mxu0 %v228
    %299 = vmatpush.msra.mxu0 %v225
    %300 = vmatpush.msra.mxu0 %v222
    %301 = vmatpush.msra.mxu0 %v219
    %302 = vmatmul.f32.gmra.mxu0 %v211
    %v303 = vpop.f32.mrf.mxu0
    %v304 = vadd.f32 0.0, %v303
    %305 = vdwg.mxu0
    %306 = vmatpush.msra.mxu0 %v265
    %307 = vmatpush.msra.mxu0 %v262
    %308 = vmatpush.msra.mxu0 %v259
    %309 = vmatpush.msra.mxu0 %v256
    %310 = vmatpush.msra.mxu0 %v253
    %311 = vmatpush.msra.mxu0 %v250
    %312 = vmatpush.msra.mxu0 %v247
    %313 = vmatpush.msra.mxu0 %v244
    %314 = vmatpush.msra.mxu0 %v241
    %315 = vmatpush.msra.mxu0 %v238
    %316 = vmatpush.msra.mxu0 %v235
    %317 = vmatpush.msra.mxu0 %v232
    %318 = vmatpush.msra.mxu0 %v229
    %319 = vmatpush.msra.mxu0 %v226
    %320 = vmatpush.msra.mxu0 %v223
    %321 = vmatpush.msra.mxu0 %v220
    %322 = vmatmul.f32.gmra.mxu0 %v211
    %v323 = vpop.f32.mrf.mxu0
    %v324 = vadd.f32 0.0, %v323
    %325 = vdwg.mxu0
    %v326 = vadd.f32 %v215, %v284
    %v327 = vmul.f32 %v326, 0.5
    %v328 = vtanh.pop %v327
    %v329 = vmul.f32 %v328, 0.5
    %v330 = vadd.f32 %v329, 0.5
    %v331 = vadd.f32 %v216, %v304
    %v332 = vmul.f32 %v331, 0.5
    %v333 = vtanh.pop %v332
    %v334 = vmul.f32 %v333, 0.5
    %v335 = vadd.f32 %v334, 0.5
    %v336 = vadd.f32 %v324, %v209
    %v337 = vmul.f32 %v330, %v336
    %v338 = vadd.f32 %v217, %v337
    %v339 = vtanh.pop %v338
    %v340 = vsub.f32 %v211, %v339
    %v341 = vmul.f32 %v335, %v340
    %v342 = vadd.f32 %v339, %v341
    %343 = vst [vmem:[#allocation3] sm:$0xff] %v342
    %s344 = smul.u32 1, 3
    %s345 = smul.addr %s344, 8
    %s346 = scalar_lea.vmem [#allocation2], %s345
    %v347 = vld [vmem:[%s346] sm:$0xff]
    %v348 = vld [vmem:[%s346 + $0x8] sm:$0xff]
    %v349 = vld [vmem:[%s346 + $0x10] sm:$0xff]
    %v350 = vld [vmem:[#allocation4] sm:$0xff]
    %v351 = vld [vmem:[#allocation4 + $0x8] sm:$0xff]
    %v352 = vld [vmem:[#allocation4 + $0x10] sm:$0xff]
    %v353 = vld [vmem:[#allocation4 + $0x18] sm:$0xff]
    %v354 = vld [vmem:[#allocation4 + $0x20] sm:$0xff]
    %v355 = vld [vmem:[#allocation4 + $0x28] sm:$0xff]
    %v356 = vld [vmem:[#allocation4 + $0x30] sm:$0xff]
    %v357 = vld [vmem:[#allocation4 + $0x38] sm:$0xff]
    %v358 = vld [vmem:[#allocation4 + $0x40] sm:$0xff]
    %v359 = vld [vmem:[#allocation4 + $0x48] sm:$0xff]
    %v360 = vld [vmem:[#allocation4 + $0x50] sm:$0xff]
    %v361 = vld [vmem:[#allocation4 + $0x58] sm:$0xff]
    %v362 = vld [vmem:[#allocation4 + $0x60] sm:$0xff]
    %v363 = vld [vmem:[#allocation4 + $0x68] sm:$0xff]
    %v364 = vld [vmem:[#allocation4 + $0x70] sm:$0xff]
    %v365 = vld [vmem:[#allocation4 + $0x78] sm:$0xff]
    %v366 = vld [vmem:[#allocation4 + $0x80] sm:$0xff]
    %v367 = vld [vmem:[#allocation4 + $0x88] sm:$0xff]
    %v368 = vld [vmem:[#allocation4 + $0x90] sm:$0xff]
    %v369 = vld [vmem:[#allocation4 + $0x98] sm:$0xff]
    %v370 = vld [vmem:[#allocation4 + $0xa0] sm:$0xff]
    %v371 = vld [vmem:[#allocation4 + $0xa8] sm:$0xff]
    %v372 = vld [vmem:[#allocation4 + $0xb0] sm:$0xff]
    %v373 = vld [vmem:[#allocation4 + $0xb8] sm:$0xff]
    %v374 = vld [vmem:[#allocation4 + $0xc0] sm:$0xff]
    %v375 = vld [vmem:[#allocation4 + $0xc8] sm:$0xff]
    %v376 = vld [vmem:[#allocation4 + $0xd0] sm:$0xff]
    %v377 = vld [vmem:[#allocation4 + $0xd8] sm:$0xff]
    %v378 = vld [vmem:[#allocation4 + $0xe0] sm:$0xff]
    %v379 = vld [vmem:[#allocation4 + $0xe8] sm:$0xff]
    %v380 = vld [vmem:[#allocation4 + $0xf0] sm:$0xff]
    %v381 = vld [vmem:[#allocation4 + $0xf8] sm:$0xff]
    %v382 = vld [vmem:[#allocation4 + $0x100] sm:$0xff]
    %v383 = vld [vmem:[#allocation4 + $0x108] sm:$0xff]
    %v384 = vld [vmem:[#allocation4 + $0x110] sm:$0xff]
    %v385 = vld [vmem:[#allocation4 + $0x118] sm:$0xff]
    %v386 = vld [vmem:[#allocation4 + $0x120] sm:$0xff]
    %v387 = vld [vmem:[#allocation4 + $0x128] sm:$0xff]
    %v388 = vld [vmem:[#allocation4 + $0x130] sm:$0xff]
    %v389 = vld [vmem:[#allocation4 + $0x138] sm:$0xff]
    %v390 = vld [vmem:[#allocation4 + $0x140] sm:$0xff]
    %v391 = vld [vmem:[#allocation4 + $0x148] sm:$0xff]
    %v392 = vld [vmem:[#allocation4 + $0x150] sm:$0xff]
    %v393 = vld [vmem:[#allocation4 + $0x158] sm:$0xff]
    %v394 = vld [vmem:[#allocation4 + $0x160] sm:$0xff]
    %v395 = vld [vmem:[#allocation4 + $0x168] sm:$0xff]
    %v396 = vld [vmem:[#allocation4 + $0x170] sm:$0xff]
    %v397 = vld [vmem:[#allocation4 + $0x178] sm:$0xff]
    %398 = vmatpush.msra.mxu0 %v395
    %399 = vmatpush.msra.mxu0 %v392
    %400 = vmatpush.msra.mxu0 %v389
    %401 = vmatpush.msra.mxu0 %v386
    %402 = vmatpush.msra.mxu0 %v383
    %403 = vmatpush.msra.mxu0 %v380
    %404 = vmatpush.msra.mxu0 %v377
    %405 = vmatpush.msra.mxu0 %v374
    %406 = vmatpush.msra.mxu0 %v371
    %407 = vmatpush.msra.mxu0 %v368
    %408 = vmatpush.msra.mxu0 %v365
    %409 = vmatpush.msra.mxu0 %v362
    %410 = vmatpush.msra.mxu0 %v359
    %411 = vmatpush.msra.mxu0 %v356
    %412 = vmatpush.msra.mxu0 %v353
    %413 = vmatpush.msra.mxu0 %v350
    %414 = vmatmul.f32.gmra.mxu0 %v342
    %v415 = vpop.f32.mrf.mxu0
    %v416 = vadd.f32 0.0, %v415
    %417 = vdwg.mxu0
    %418 = vmatpush.msra.mxu0 %v396
    %419 = vmatpush.msra.mxu0 %v393
    %420 = vmatpush.msra.mxu0 %v390
    %421 = vmatpush.msra.mxu0 %v387
    %422 = vmatpush.msra.mxu0 %v384
    %423 = vmatpush.msra.mxu0 %v381
    %424 = vmatpush.msra.mxu0 %v378
    %425 = vmatpush.msra.mxu0 %v375
    %426 = vmatpush.msra.mxu0 %v372
    %427 = vmatpush.msra.mxu0 %v369
    %428 = vmatpush.msra.mxu0 %v366
    %429 = vmatpush.msra.mxu0 %v363
    %430 = vmatpush.msra.mxu0 %v360
    %431 = vmatpush.msra.mxu0 %v357
    %432 = vmatpush.msra.mxu0 %v354
    %433 = vmatpush.msra.mxu0 %v351
    %434 = vmatmul.f32.gmra.mxu0 %v342
    %v435 = vpop.f32.mrf.mxu0
    %v436 = vadd.f32 0.0, %v435
    %437 = vdwg.mxu0
    %438 = vmatpush.msra.mxu0 %v397
    %439 = vmatpush.msra.mxu0 %v394
    %440 = vmatpush.msra.mxu0 %v391
    %441 = vmatpush.msra.mxu0 %v388
    %442 = vmatpush.msra.mxu0 %v385
    %443 = vmatpush.msra.mxu0 %v382
    %444 = vmatpush.msra.mxu0 %v379
    %445 = vmatpush.msra.mxu0 %v376
    %446 = vmatpush.msra.mxu0 %v373
    %447 = vmatpush.msra.mxu0 %v370
    %448 = vmatpush.msra.mxu0 %v367
    %449 = vmatpush.msra.mxu0 %v364
    %450 = vmatpush.msra.mxu0 %v361
    %451 = vmatpush.msra.mxu0 %v358
    %452 = vmatpush.msra.mxu0 %v355
    %453 = vmatpush.msra.mxu0 %v352
    %454 = vmatmul.f32.gmra.mxu0 %v342
    %v455 = vpop.f32.mrf.mxu0
    %v456 = vadd.f32 0.0, %v455
    %457 = vdwg.mxu0
    %v458 = vadd.f32 %v347, %v416
    %v459 = vmul.f32 %v458, 0.5
    %v460 = vtanh.pop %v459
    %v461 = vmul.f32 %v460, 0.5
    %v462 = vadd.f32 %v461, 0.5
    %v463 = vadd.f32 %v348, %v436
    %v464 = vmul.f32 %v463, 0.5
    %v465 = vtanh.pop %v464
    %v466 = vmul.f32 %v465, 0.5
    %v467 = vadd.f32 %v466, 0.5
    %v468 = vadd.f32 %v456, %v209
    %v469 = vmul.f32 %v462, %v468
    %v470 = vadd.f32 %v349, %v469
    %v471 = vtanh.pop %v470
    %v472 = vsub.f32 %v342, %v471
    %v473 = vmul.f32 %v467, %v472
    %v474 = vadd.f32 %v471, %v473
    %s475 = scalar_lea.vmem [#allocation3], 8
    %476 = vst [vmem:[%s475] sm:$0xff] %v474
    %s477 = smul.u32 2, 3
    %s478 = smul.addr %s477, 8
    %s479 = scalar_lea.vmem [#allocation2], %s478
    %v480 = vld [vmem:[%s479] sm:$0xff]
    %v481 = vld [vmem:[%s479 + $0x8] sm:$0xff]
    %v482 = vld [vmem:[%s479 + $0x10] sm:$0xff]
    %v483 = vld [vmem:[#allocation4] sm:$0xff]
    %v484 = vld [vmem:[#allocation4 + $0x8] sm:$0xff]
    %v485 = vld [vmem:[#allocation4 + $0x10] sm:$0xff]
    %v486 = vld [vmem:[#allocation4 + $0x18] sm:$0xff]
    %v487 = vld [vmem:[#allocation4 + $0x20] sm:$0xff]
    %v488 = vld [vmem:[#allocation4 + $0x28] sm:$0xff]
    %v489 = vld [vmem:[#allocation4 + $0x30] sm:$0xff]
    %v490 = vld [vmem:[#allocation4 + $0x38] sm:$0xff]
    %v491 = vld [vmem:[#allocation4 + $0x40] sm:$0xff]
    %v492 = vld [vmem:[#allocation4 + $0x48] sm:$0xff]
    %v493 = vld [vmem:[#allocation4 + $0x50] sm:$0xff]
    %v494 = vld [vmem:[#allocation4 + $0x58] sm:$0xff]
    %v495 = vld [vmem:[#allocation4 + $0x60] sm:$0xff]
    %v496 = vld [vmem:[#allocation4 + $0x68] sm:$0xff]
    %v497 = vld [vmem:[#allocation4 + $0x70] sm:$0xff]
    %v498 = vld [vmem:[#allocation4 + $0x78] sm:$0xff]
    %v499 = vld [vmem:[#allocation4 + $0x80] sm:$0xff]
    %v500 = vld [vmem:[#allocation4 + $0x88] sm:$0xff]
    %v501 = vld [vmem:[#allocation4 + $0x90] sm:$0xff]
    %v502 = vld [vmem:[#allocation4 + $0x98] sm:$0xff]
    %v503 = vld [vmem:[#allocation4 + $0xa0] sm:$0xff]
    %v504 = vld [vmem:[#allocation4 + $0xa8] sm:$0xff]
    %v505 = vld [vmem:[#allocation4 + $0xb0] sm:$0xff]
    %v506 = vld [vmem:[#allocation4 + $0xb8] sm:$0xff]
    %v507 = vld [vmem:[#allocation4 + $0xc0] sm:$0xff]
    %v508 = vld [vmem:[#allocation4 + $0xc8] sm:$0xff]
    %v509 = vld [vmem:[#allocation4 + $0xd0] sm:$0xff]
    %v510 = vld [vmem:[#allocation4 + $0xd8] sm:$0xff]
    %v511 = vld [vmem:[#allocation4 + $0xe0] sm:$0xff]
    %v512 = vld [vmem:[#allocation4 + $0xe8] sm:$0xff]
    %v513 = vld [vmem:[#allocation4 + $0xf0] sm:$0xff]
    %v514 = vld [vmem:[#allocation4 + $0xf8] sm:$0xff]
    %v515 = vld [vmem:[#allocation4 + $0x100] sm:$0xff]
    %v516 = vld [vmem:[#allocation4 + $0x108] sm:$0xff]
    %v517 = vld [vmem:[#allocation4 + $0x110] sm:$0xff]
    %v518 = vld [vmem:[#allocation4 + $0x118] sm:$0xff]
    %v519 = vld [vmem:[#allocation4 + $0x120] sm:$0xff]
    %v520 = vld [vmem:[#allocation4 + $0x128] sm:$0xff]
    %v521 = vld [vmem:[#allocation4 + $0x130] sm:$0xff]
    %v522 = vld [vmem:[#allocation4 + $0x138] sm:$0xff]
    %v523 = vld [vmem:[#allocation4 + $0x140] sm:$0xff]
    %v524 = vld [vmem:[#allocation4 + $0x148] sm:$0xff]
    %v525 = vld [vmem:[#allocation4 + $0x150] sm:$0xff]
    %v526 = vld [vmem:[#allocation4 + $0x158] sm:$0xff]
    %v527 = vld [vmem:[#allocation4 + $0x160] sm:$0xff]
    %v528 = vld [vmem:[#allocation4 + $0x168] sm:$0xff]
    %v529 = vld [vmem:[#allocation4 + $0x170] sm:$0xff]
    %v530 = vld [vmem:[#allocation4 + $0x178] sm:$0xff]
    %531 = vmatpush.msra.mxu0 %v528
    %532 = vmatpush.msra.mxu0 %v525
    %533 = vmatpush.msra.mxu0 %v522
    %534 = vmatpush.msra.mxu0 %v519
    %535 = vmatpush.msra.mxu0 %v516
    %536 = vmatpush.msra.mxu0 %v513
    %537 = vmatpush.msra.mxu0 %v510
    %538 = vmatpush.msra.mxu0 %v507
    %539 = vmatpush.msra.mxu0 %v504
    %540 = vmatpush.msra.mxu0 %v501
    %541 = vmatpush.msra.mxu0 %v498
    %542 = vmatpush.msra.mxu0 %v495
    %543 = vmatpush.msra.mxu0 %v492
    %544 = vmatpush.msra.mxu0 %v489
    %545 = vmatpush.msra.mxu0 %v486
    %546 = vmatpush.msra.mxu0 %v483
    %547 = vmatmul.f32.gmra.mxu0 %v474
    %v548 = vpop.f32.mrf.mxu0
    %v549 = vadd.f32 0.0, %v548
    %550 = vdwg.mxu0
    %551 = vmatpush.msra.mxu0 %v529
    %552 = vmatpush.msra.mxu0 %v526
    %553 = vmatpush.msra.mxu0 %v523
    %554 = vmatpush.msra.mxu0 %v520
    %555 = vmatpush.msra.mxu0 %v517
    %556 = vmatpush.msra.mxu0 %v514
    %557 = vmatpush.msra.mxu0 %v511
    %558 = vmatpush.msra.mxu0 %v508
    %559 = vmatpush.msra.mxu0 %v505
    %560 = vmatpush.msra.mxu0 %v502
    %561 = vmatpush.msra.mxu0 %v499
    %562 = vmatpush.msra.mxu0 %v496
    %563 = vmatpush.msra.mxu0 %v493
    %564 = vmatpush.msra.mxu0 %v490
    %565 = vmatpush.msra.mxu0 %v487
    %566 = vmatpush.msra.mxu0 %v484
    %567 = vmatmul.f32.gmra.mxu0 %v474
    %v568 = vpop.f32.mrf.mxu0
    %v569 = vadd.f32 0.0, %v568
    %570 = vdwg.mxu0
    %571 = vmatpush.msra.mxu0 %v530
    %572 = vmatpush.msra.mxu0 %v527
    %573 = vmatpush.msra.mxu0 %v524
    %574 = vmatpush.msra.mxu0 %v521
    %575 = vmatpush.msra.mxu0 %v518
    %576 = vmatpush.msra.mxu0 %v515
    %577 = vmatpush.msra.mxu0 %v512
    %578 = vmatpush.msra.mxu0 %v509
    %579 = vmatpush.msra.mxu0 %v506
    %580 = vmatpush.msra.mxu0 %v503
    %581 = vmatpush.msra.mxu0 %v500
    %582 = vmatpush.msra.mxu0 %v497
    %583 = vmatpush.msra.mxu0 %v494
    %584 = vmatpush.msra.mxu0 %v491
    %585 = vmatpush.msra.mxu0 %v488
    %586 = vmatpush.msra.mxu0 %v485
    %587 = vmatmul.f32.gmra.mxu0 %v474
    %v588 = vpop.f32.mrf.mxu0
    %v589 = vadd.f32 0.0, %v588
    %590 = vdwg.mxu0
    %v591 = vadd.f32 %v480, %v549
    %v592 = vmul.f32 %v591, 0.5
    %v593 = vtanh.pop %v592
    %v594 = vmul.f32 %v593, 0.5
    %v595 = vadd.f32 %v594, 0.5
    %v596 = vadd.f32 %v481, %v569
    %v597 = vmul.f32 %v596, 0.5
    %v598 = vtanh.pop %v597
    %v599 = vmul.f32 %v598, 0.5
    %v600 = vadd.f32 %v599, 0.5
    %v601 = vadd.f32 %v589, %v209
    %v602 = vmul.f32 %v595, %v601
    %v603 = vadd.f32 %v482, %v602
    %v604 = vtanh.pop %v603
    %v605 = vsub.f32 %v474, %v604
    %v606 = vmul.f32 %v600, %v605
    %v607 = vadd.f32 %v604, %v606
    %s608 = scalar_lea.vmem [#allocation3], 16
    %609 = vst [vmem:[%s608] sm:$0xff] %v607
    %s610 = smul.u32 3, 3
    %s611 = smul.addr %s610, 8
    %s612 = scalar_lea.vmem [#allocation2], %s611
    %v613 = vld [vmem:[%s612] sm:$0xff]
    %v614 = vld [vmem:[%s612 + $0x8] sm:$0xff]
    %v615 = vld [vmem:[%s612 + $0x10] sm:$0xff]
    %v616 = vld [vmem:[#allocation4] sm:$0xff]
    %v617 = vld [vmem:[#allocation4 + $0x8] sm:$0xff]
    %v618 = vld [vmem:[#allocation4 + $0x10] sm:$0xff]
    %v619 = vld [vmem:[#allocation4 + $0x18] sm:$0xff]
    %v620 = vld [vmem:[#allocation4 + $0x20] sm:$0xff]
    %v621 = vld [vmem:[#allocation4 + $0x28] sm:$0xff]
    %v622 = vld [vmem:[#allocation4 + $0x30] sm:$0xff]
    %v623 = vld [vmem:[#allocation4 + $0x38] sm:$0xff]
    %v624 = vld [vmem:[#allocation4 + $0x40] sm:$0xff]
    %v625 = vld [vmem:[#allocation4 + $0x48] sm:$0xff]
    %v626 = vld [vmem:[#allocation4 + $0x50] sm:$0xff]
    %v627 = vld [vmem:[#allocation4 + $0x58] sm:$0xff]
    %v628 = vld [vmem:[#allocation4 + $0x60] sm:$0xff]
    %v629 = vld [vmem:[#allocation4 + $0x68] sm:$0xff]
    %v630 = vld [vmem:[#allocation4 + $0x70] sm:$0xff]
    %v631 = vld [vmem:[#allocation4 + $0x78] sm:$0xff]
    %v632 = vld [vmem:[#allocation4 + $0x80] sm:$0xff]
    %v633 = vld [vmem:[#allocation4 + $0x88] sm:$0xff]
    %v634 = vld [vmem:[#allocation4 + $0x90] sm:$0xff]
    %v635 = vld [vmem:[#allocation4 + $0x98] sm:$0xff]
    %v636 = vld [vmem:[#allocation4 + $0xa0] sm:$0xff]
    %v637 = vld [vmem:[#allocation4 + $0xa8] sm:$0xff]
    %v638 = vld [vmem:[#allocation4 + $0xb0] sm:$0xff]
    %v639 = vld [vmem:[#allocation4 + $0xb8] sm:$0xff]
    %v640 = vld [vmem:[#allocation4 + $0xc0] sm:$0xff]
    %v641 = vld [vmem:[#allocation4 + $0xc8] sm:$0xff]
    %v642 = vld [vmem:[#allocation4 + $0xd0] sm:$0xff]
    %v643 = vld [vmem:[#allocation4 + $0xd8] sm:$0xff]
    %v644 = vld [vmem:[#allocation4 + $0xe0] sm:$0xff]
    %v645 = vld [vmem:[#allocation4 + $0xe8] sm:$0xff]
    %v646 = vld [vmem:[#allocation4 + $0xf0] sm:$0xff]
    %v647 = vld [vmem:[#allocation4 + $0xf8] sm:$0xff]
    %v648 = vld [vmem:[#allocation4 + $0x100] sm:$0xff]
    %v649 = vld [vmem:[#allocation4 + $0x108] sm:$0xff]
    %v650 = vld [vmem:[#allocation4 + $0x110] sm:$0xff]
    %v651 = vld [vmem:[#allocation4 + $0x118] sm:$0xff]
    %v652 = vld [vmem:[#allocation4 + $0x120] sm:$0xff]
    %v653 = vld [vmem:[#allocation4 + $0x128] sm:$0xff]
    %v654 = vld [vmem:[#allocation4 + $0x130] sm:$0xff]
    %v655 = vld [vmem:[#allocation4 + $0x138] sm:$0xff]
    %v656 = vld [vmem:[#allocation4 + $0x140] sm:$0xff]
    %v657 = vld [vmem:[#allocation4 + $0x148] sm:$0xff]
    %v658 = vld [vmem:[#allocation4 + $0x150] sm:$0xff]
    %v659 = vld [vmem:[#allocation4 + $0x158] sm:$0xff]
    %v660 = vld [vmem:[#allocation4 + $0x160] sm:$0xff]
    %v661 = vld [vmem:[#allocation4 + $0x168] sm:$0xff]
    %v662 = vld [vmem:[#allocation4 + $0x170] sm:$0xff]
    %v663 = vld [vmem:[#allocation4 + $0x178] sm:$0xff]
    %664 = vmatpush.msra.mxu0 %v661
    %665 = vmatpush.msra.mxu0 %v658
    %666 = vmatpush.msra.mxu0 %v655
    %667 = vmatpush.msra.mxu0 %v652
    %668 = vmatpush.msra.mxu0 %v649
    %669 = vmatpush.msra.mxu0 %v646
    %670 = vmatpush.msra.mxu0 %v643
    %671 = vmatpush.msra.mxu0 %v640
    %672 = vmatpush.msra.mxu0 %v637
    %673 = vmatpush.msra.mxu0 %v634
    %674 = vmatpush.msra.mxu0 %v631
    %675 = vmatpush.msra.mxu0 %v628
    %676 = vmatpush.msra.mxu0 %v625
    %677 = vmatpush.msra.mxu0 %v622
    %678 = vmatpush.msra.mxu0 %v619
    %679 = vmatpush.msra.mxu0 %v616
    %680 = vmatmul.f32.gmra.mxu0 %v607
    %v681 = vpop.f32.mrf.mxu0
    %v682 = vadd.f32 0.0, %v681
    %683 = vdwg.mxu0
    %684 = vmatpush.msra.mxu0 %v662
    %685 = vmatpush.msra.mxu0 %v659
    %686 = vmatpush.msra.mxu0 %v656
    %687 = vmatpush.msra.mxu0 %v653
    %688 = vmatpush.msra.mxu0 %v650
    %689 = vmatpush.msra.mxu0 %v647
    %690 = vmatpush.msra.mxu0 %v644
    %691 = vmatpush.msra.mxu0 %v641
    %692 = vmatpush.msra.mxu0 %v638
    %693 = vmatpush.msra.mxu0 %v635
    %694 = vmatpush.msra.mxu0 %v632
    %695 = vmatpush.msra.mxu0 %v629
    %696 = vmatpush.msra.mxu0 %v626
    %697 = vmatpush.msra.mxu0 %v623
    %698 = vmatpush.msra.mxu0 %v620
    %699 = vmatpush.msra.mxu0 %v617
    %700 = vmatmul.f32.gmra.mxu0 %v607
    %v701 = vpop.f32.mrf.mxu0
    %v702 = vadd.f32 0.0, %v701
    %703 = vdwg.mxu0
    %704 = vmatpush.msra.mxu0 %v663
    %705 = vmatpush.msra.mxu0 %v660
    %706 = vmatpush.msra.mxu0 %v657
    %707 = vmatpush.msra.mxu0 %v654
    %708 = vmatpush.msra.mxu0 %v651
    %709 = vmatpush.msra.mxu0 %v648
    %710 = vmatpush.msra.mxu0 %v645
    %711 = vmatpush.msra.mxu0 %v642
    %712 = vmatpush.msra.mxu0 %v639
    %713 = vmatpush.msra.mxu0 %v636
    %714 = vmatpush.msra.mxu0 %v633
    %715 = vmatpush.msra.mxu0 %v630
    %716 = vmatpush.msra.mxu0 %v627
    %717 = vmatpush.msra.mxu0 %v624
    %718 = vmatpush.msra.mxu0 %v621
    %719 = vmatpush.msra.mxu0 %v618
    %720 = vmatmul.f32.gmra.mxu0 %v607
    %v721 = vpop.f32.mrf.mxu0
    %v722 = vadd.f32 0.0, %v721
    %723 = vdwg.mxu0
    %v724 = vadd.f32 %v613, %v682
    %v725 = vmul.f32 %v724, 0.5
    %v726 = vtanh.pop %v725
    %v727 = vmul.f32 %v726, 0.5
    %v728 = vadd.f32 %v727, 0.5
    %v729 = vadd.f32 %v614, %v702
    %v730 = vmul.f32 %v729, 0.5
    %v731 = vtanh.pop %v730
    %v732 = vmul.f32 %v731, 0.5
    %v733 = vadd.f32 %v732, 0.5
    %v734 = vadd.f32 %v722, %v209
    %v735 = vmul.f32 %v728, %v734
    %v736 = vadd.f32 %v615, %v735
    %v737 = vtanh.pop %v736
    %v738 = vsub.f32 %v607, %v737
    %v739 = vmul.f32 %v733, %v738
    %v740 = vadd.f32 %v737, %v739
    %s741 = scalar_lea.vmem [#allocation3], 24
    %742 = vst [vmem:[%s741] sm:$0xff] %v740
    %s743 = smul.u32 4, 3
    %s744 = smul.addr %s743, 8
    %s745 = scalar_lea.vmem [#allocation2], %s744
    %v746 = vld [vmem:[%s745] sm:$0xff]
    %v747 = vld [vmem:[%s745 + $0x8] sm:$0xff]
    %v748 = vld [vmem:[%s745 + $0x10] sm:$0xff]
    %v749 = vld [vmem:[#allocation4] sm:$0xff]
    %v750 = vld [vmem:[#allocation4 + $0x8] sm:$0xff]
    %v751 = vld [vmem:[#allocation4 + $0x10] sm:$0xff]
    %v752 = vld [vmem:[#allocation4 + $0x18] sm:$0xff]
    %v753 = vld [vmem:[#allocation4 + $0x20] sm:$0xff]
    %v754 = vld [vmem:[#allocation4 + $0x28] sm:$0xff]
    %v755 = vld [vmem:[#allocation4 + $0x30] sm:$0xff]
    %v756 = vld [vmem:[#allocation4 + $0x38] sm:$0xff]
    %v757 = vld [vmem:[#allocation4 + $0x40] sm:$0xff]
    %v758 = vld [vmem:[#allocation4 + $0x48] sm:$0xff]
    %v759 = vld [vmem:[#allocation4 + $0x50] sm:$0xff]
    %v760 = vld [vmem:[#allocation4 + $0x58] sm:$0xff]
    %v761 = vld [vmem:[#allocation4 + $0x60] sm:$0xff]
    %v762 = vld [vmem:[#allocation4 + $0x68] sm:$0xff]
    %v763 = vld [vmem:[#allocation4 + $0x70] sm:$0xff]
    %v764 = vld [vmem:[#allocation4 + $0x78] sm:$0xff]
    %v765 = vld [vmem:[#allocation4 + $0x80] sm:$0xff]
    %v766 = vld [vmem:[#allocation4 + $0x88] sm:$0xff]
    %v767 = vld [vmem:[#allocation4 + $0x90] sm:$0xff]
    %v768 = vld [vmem:[#allocation4 + $0x98] sm:$0xff]
    %v769 = vld [vmem:[#allocation4 + $0xa0] sm:$0xff]
    %v770 = vld [vmem:[#allocation4 + $0xa8] sm:$0xff]
    %v771 = vld [vmem:[#allocation4 + $0xb0] sm:$0xff]
    %v772 = vld [vmem:[#allocation4 + $0xb8] sm:$0xff]
    %v773 = vld [vmem:[#allocation4 + $0xc0] sm:$0xff]
    %v774 = vld [vmem:[#allocation4 + $0xc8] sm:$0xff]
    %v775 = vld [vmem:[#allocation4 + $0xd0] sm:$0xff]
    %v776 = vld [vmem:[#allocation4 + $0xd8] sm:$0xff]
    %v777 = vld [vmem:[#allocation4 + $0xe0] sm:$0xff]
    %v778 = vld [vmem:[#allocation4 + $0xe8] sm:$0xff]
    %v779 = vld [vmem:[#allocation4 + $0xf0] sm:$0xff]
    %v780 = vld [vmem:[#allocation4 + $0xf8] sm:$0xff]
    %v781 = vld [vmem:[#allocation4 + $0x100] sm:$0xff]
    %v782 = vld [vmem:[#allocation4 + $0x108] sm:$0xff]
    %v783 = vld [vmem:[#allocation4 + $0x110] sm:$0xff]
    %v784 = vld [vmem:[#allocation4 + $0x118] sm:$0xff]
    %v785 = vld [vmem:[#allocation4 + $0x120] sm:$0xff]
    %v786 = vld [vmem:[#allocation4 + $0x128] sm:$0xff]
    %v787 = vld [vmem:[#allocation4 + $0x130] sm:$0xff]
    %v788 = vld [vmem:[#allocation4 + $0x138] sm:$0xff]
    %v789 = vld [vmem:[#allocation4 + $0x140] sm:$0xff]
    %v790 = vld [vmem:[#allocation4 + $0x148] sm:$0xff]
    %v791 = vld [vmem:[#allocation4 + $0x150] sm:$0xff]
    %v792 = vld [vmem:[#allocation4 + $0x158] sm:$0xff]
    %v793 = vld [vmem:[#allocation4 + $0x160] sm:$0xff]
    %v794 = vld [vmem:[#allocation4 + $0x168] sm:$0xff]
    %v795 = vld [vmem:[#allocation4 + $0x170] sm:$0xff]
    %v796 = vld [vmem:[#allocation4 + $0x178] sm:$0xff]
    %797 = vmatpush.msra.mxu0 %v794
    %798 = vmatpush.msra.mxu0 %v791
    %799 = vmatpush.msra.mxu0 %v788
    %800 = vmatpush.msra.mxu0 %v785
    %801 = vmatpush.msra.mxu0 %v782
    %802 = vmatpush.msra.mxu0 %v779
    %803 = vmatpush.msra.mxu0 %v776
    %804 = vmatpush.msra.mxu0 %v773
    %805 = vmatpush.msra.mxu0 %v770
    %806 = vmatpush.msra.mxu0 %v767
    %807 = vmatpush.msra.mxu0 %v764
    %808 = vmatpush.msra.mxu0 %v761
    %809 = vmatpush.msra.mxu0 %v758
    %810 = vmatpush.msra.mxu0 %v755
    %811 = vmatpush.msra.mxu0 %v752
    %812 = vmatpush.msra.mxu0 %v749
    %813 = vmatmul.f32.gmra.mxu0 %v740
    %v814 = vpop.f32.mrf.mxu0
    %v815 = vadd.f32 0.0, %v814
    %816 = vdwg.mxu0
    %817 = vmatpush.msra.mxu0 %v795
    %818 = vmatpush.msra.mxu0 %v792
    %819 = vmatpush.msra.mxu0 %v789
    %820 = vmatpush.msra.mxu0 %v786
    %821 = vmatpush.msra.mxu0 %v783
    %822 = vmatpush.msra.mxu0 %v780
    %823 = vmatpush.msra.mxu0 %v777
    %824 = vmatpush.msra.mxu0 %v774
    %825 = vmatpush.msra.mxu0 %v771
    %826 = vmatpush.msra.mxu0 %v768
    %827 = vmatpush.msra.mxu0 %v765
    %828 = vmatpush.msra.mxu0 %v762
    %829 = vmatpush.msra.mxu0 %v759
    %830 = vmatpush.msra.mxu0 %v756
    %831 = vmatpush.msra.mxu0 %v753
    %832 = vmatpush.msra.mxu0 %v750
    %833 = vmatmul.f32.gmra.mxu0 %v740
    %v834 = vpop.f32.mrf.mxu0
    %v835 = vadd.f32 0.0, %v834
    %836 = vdwg.mxu0
    %837 = vmatpush.msra.mxu0 %v796
    %838 = vmatpush.msra.mxu0 %v793
    %839 = vmatpush.msra.mxu0 %v790
    %840 = vmatpush.msra.mxu0 %v787
    %841 = vmatpush.msra.mxu0 %v784
    %842 = vmatpush.msra.mxu0 %v781
    %843 = vmatpush.msra.mxu0 %v778
    %844 = vmatpush.msra.mxu0 %v775
    %845 = vmatpush.msra.mxu0 %v772
    %846 = vmatpush.msra.mxu0 %v769
    %847 = vmatpush.msra.mxu0 %v766
    %848 = vmatpush.msra.mxu0 %v763
    %849 = vmatpush.msra.mxu0 %v760
    %850 = vmatpush.msra.mxu0 %v757
    %851 = vmatpush.msra.mxu0 %v754
    %852 = vmatpush.msra.mxu0 %v751
    %853 = vmatmul.f32.gmra.mxu0 %v740
    %v854 = vpop.f32.mrf.mxu0
    %v855 = vadd.f32 0.0, %v854
    %856 = vdwg.mxu0
    %v857 = vadd.f32 %v746, %v815
    %v858 = vmul.f32 %v857, 0.5
    %v859 = vtanh.pop %v858
    %v860 = vmul.f32 %v859, 0.5
    %v861 = vadd.f32 %v860, 0.5
    %v862 = vadd.f32 %v747, %v835
    %v863 = vmul.f32 %v862, 0.5
    %v864 = vtanh.pop %v863
    %v865 = vmul.f32 %v864, 0.5
    %v866 = vadd.f32 %v865, 0.5
    %v867 = vadd.f32 %v855, %v209
    %v868 = vmul.f32 %v861, %v867
    %v869 = vadd.f32 %v748, %v868
    %v870 = vtanh.pop %v869
    %v871 = vsub.f32 %v740, %v870
    %v872 = vmul.f32 %v866, %v871
    %v873 = vadd.f32 %v870, %v872
    %s874 = scalar_lea.vmem [#allocation3], 32
    %875 = vst [vmem:[%s874] sm:$0xff] %v873
    %s876 = smul.u32 5, 3
    %s877 = smul.addr %s876, 8
    %s878 = scalar_lea.vmem [#allocation2], %s877
    %v879 = vld [vmem:[%s878] sm:$0xff]
    %v880 = vld [vmem:[%s878 + $0x8] sm:$0xff]
    %v881 = vld [vmem:[%s878 + $0x10] sm:$0xff]
    %v882 = vld [vmem:[#allocation4] sm:$0xff]
    %v883 = vld [vmem:[#allocation4 + $0x8] sm:$0xff]
    %v884 = vld [vmem:[#allocation4 + $0x10] sm:$0xff]
    %v885 = vld [vmem:[#allocation4 + $0x18] sm:$0xff]
    %v886 = vld [vmem:[#allocation4 + $0x20] sm:$0xff]
    %v887 = vld [vmem:[#allocation4 + $0x28] sm:$0xff]
    %v888 = vld [vmem:[#allocation4 + $0x30] sm:$0xff]
    %v889 = vld [vmem:[#allocation4 + $0x38] sm:$0xff]
    %v890 = vld [vmem:[#allocation4 + $0x40] sm:$0xff]
    %v891 = vld [vmem:[#allocation4 + $0x48] sm:$0xff]
    %v892 = vld [vmem:[#allocation4 + $0x50] sm:$0xff]
    %v893 = vld [vmem:[#allocation4 + $0x58] sm:$0xff]
    %v894 = vld [vmem:[#allocation4 + $0x60] sm:$0xff]
    %v895 = vld [vmem:[#allocation4 + $0x68] sm:$0xff]
    %v896 = vld [vmem:[#allocation4 + $0x70] sm:$0xff]
    %v897 = vld [vmem:[#allocation4 + $0x78] sm:$0xff]
    %v898 = vld [vmem:[#allocation4 + $0x80] sm:$0xff]
    %v899 = vld [vmem:[#allocation4 + $0x88] sm:$0xff]
    %v900 = vld [vmem:[#allocation4 + $0x90] sm:$0xff]
    %v901 = vld [vmem:[#allocation4 + $0x98] sm:$0xff]
    %v902 = vld [vmem:[#allocation4 + $0xa0] sm:$0xff]
    %v903 = vld [vmem:[#allocation4 + $0xa8] sm:$0xff]
    %v904 = vld [vmem:[#allocation4 + $0xb0] sm:$0xff]
    %v905 = vld [vmem:[#allocation4 + $0xb8] sm:$0xff]
    %v906 = vld [vmem:[#allocation4 + $0xc0] sm:$0xff]
    %v907 = vld [vmem:[#allocation4 + $0xc8] sm:$0xff]
    %v908 = vld [vmem:[#allocation4 + $0xd0] sm:$0xff]
    %v909 = vld [vmem:[#allocation4 + $0xd8] sm:$0xff]
    %v910 = vld [vmem:[#allocation4 + $0xe0] sm:$0xff]
    %v911 = vld [vmem:[#allocation4 + $0xe8] sm:$0xff]
    %v912 = vld [vmem:[#allocation4 + $0xf0] sm:$0xff]
    %v913 = vld [vmem:[#allocation4 + $0xf8] sm:$0xff]
    %v914 = vld [vmem:[#allocation4 + $0x100] sm:$0xff]
    %v915 = vld [vmem:[#allocation4 + $0x108] sm:$0xff]
    %v916 = vld [vmem:[#allocation4 + $0x110] sm:$0xff]
    %v917 = vld [vmem:[#allocation4 + $0x118] sm:$0xff]
    %v918 = vld [vmem:[#allocation4 + $0x120] sm:$0xff]
    %v919 = vld [vmem:[#allocation4 + $0x128] sm:$0xff]
    %v920 = vld [vmem:[#allocation4 + $0x130] sm:$0xff]
    %v921 = vld [vmem:[#allocation4 + $0x138] sm:$0xff]
    %v922 = vld [vmem:[#allocation4 + $0x140] sm:$0xff]
    %v923 = vld [vmem:[#allocation4 + $0x148] sm:$0xff]
    %v924 = vld [vmem:[#allocation4 + $0x150] sm:$0xff]
    %v925 = vld [vmem:[#allocation4 + $0x158] sm:$0xff]
    %v926 = vld [vmem:[#allocation4 + $0x160] sm:$0xff]
    %v927 = vld [vmem:[#allocation4 + $0x168] sm:$0xff]
    %v928 = vld [vmem:[#allocation4 + $0x170] sm:$0xff]
    %v929 = vld [vmem:[#allocation4 + $0x178] sm:$0xff]
    %930 = vmatpush.msra.mxu0 %v927
    %931 = vmatpush.msra.mxu0 %v924
    %932 = vmatpush.msra.mxu0 %v921
    %933 = vmatpush.msra.mxu0 %v918
    %934 = vmatpush.msra.mxu0 %v915
    %935 = vmatpush.msra.mxu0 %v912
    %936 = vmatpush.msra.mxu0 %v909
    %937 = vmatpush.msra.mxu0 %v906
    %938 = vmatpush.msra.mxu0 %v903
    %939 = vmatpush.msra.mxu0 %v900
    %940 = vmatpush.msra.mxu0 %v897
    %941 = vmatpush.msra.mxu0 %v894
    %942 = vmatpush.msra.mxu0 %v891
    %943 = vmatpush.msra.mxu0 %v888
    %944 = vmatpush.msra.mxu0 %v885
    %945 = vmatpush.msra.mxu0 %v882
    %946 = vmatmul.f32.gmra.mxu0 %v873
    %v947 = vpop.f32.mrf.mxu0
    %v948 = vadd.f32 0.0, %v947
    %949 = vdwg.mxu0
    %950 = vmatpush.msra.mxu0 %v928
    %951 = vmatpush.msra.mxu0 %v925
    %952 = vmatpush.msra.mxu0 %v922
    %953 = vmatpush.msra.mxu0 %v919
    %954 = vmatpush.msra.mxu0 %v916
    %955 = vmatpush.msra.mxu0 %v913
    %956 = vmatpush.msra.mxu0 %v910
    %957 = vmatpush.msra.mxu0 %v907
    %958 = vmatpush.msra.mxu0 %v904
    %959 = vmatpush.msra.mxu0 %v901
    %960 = vmatpush.msra.mxu0 %v898
    %961 = vmatpush.msra.mxu0 %v895
    %962 = vmatpush.msra.mxu0 %v892
    %963 = vmatpush.msra.mxu0 %v889
    %964 = vmatpush.msra.mxu0 %v886
    %965 = vmatpush.msra.mxu0 %v883
    %966 = vmatmul.f32.gmra.mxu0 %v873
    %v967 = vpop.f32.mrf.mxu0
    %v968 = vadd.f32 0.0, %v967
    %969 = vdwg.mxu0
    %970 = vmatpush.msra.mxu0 %v929
    %971 = vmatpush.msra.mxu0 %v926
    %972 = vmatpush.msra.mxu0 %v923
    %973 = vmatpush.msra.mxu0 %v920
    %974 = vmatpush.msra.mxu0 %v917
    %975 = vmatpush.msra.mxu0 %v914
    %976 = vmatpush.msra.mxu0 %v911
    %977 = vmatpush.msra.mxu0 %v908
    %978 = vmatpush.msra.mxu0 %v905
    %979 = vmatpush.msra.mxu0 %v902
    %980 = vmatpush.msra.mxu0 %v899
    %981 = vmatpush.msra.mxu0 %v896
    %982 = vmatpush.msra.mxu0 %v893
    %983 = vmatpush.msra.mxu0 %v890
    %984 = vmatpush.msra.mxu0 %v887
    %985 = vmatpush.msra.mxu0 %v884
    %986 = vmatmul.f32.gmra.mxu0 %v873
    %v987 = vpop.f32.mrf.mxu0
    %v988 = vadd.f32 0.0, %v987
    %989 = vdwg.mxu0
    %v990 = vadd.f32 %v879, %v948
    %v991 = vmul.f32 %v990, 0.5
    %v992 = vtanh.pop %v991
    %v993 = vmul.f32 %v992, 0.5
    %v994 = vadd.f32 %v993, 0.5
    %v995 = vadd.f32 %v880, %v968
    %v996 = vmul.f32 %v995, 0.5
    %v997 = vtanh.pop %v996
    %v998 = vmul.f32 %v997, 0.5
    %v999 = vadd.f32 %v998, 0.5
    %v1000 = vadd.f32 %v988, %v209
    %v1001 = vmul.f32 %v994, %v1000
    %v1002 = vadd.f32 %v881, %v1001
    %v1003 = vtanh.pop %v1002
    %v1004 = vsub.f32 %v873, %v1003
    %v1005 = vmul.f32 %v999, %v1004
    %v1006 = vadd.f32 %v1003, %v1005
    %s1007 = scalar_lea.vmem [#allocation3], 40
    %1008 = vst [vmem:[%s1007] sm:$0xff] %v1006
    %s1009 = smul.u32 6, 3
    %s1010 = smul.addr %s1009, 8
    %s1011 = scalar_lea.vmem [#allocation2], %s1010
    %v1012 = vld [vmem:[%s1011] sm:$0xff]
    %v1013 = vld [vmem:[%s1011 + $0x8] sm:$0xff]
    %v1014 = vld [vmem:[%s1011 + $0x10] sm:$0xff]
    %v1015 = vld [vmem:[#allocation4] sm:$0xff]
    %v1016 = vld [vmem:[#allocation4 + $0x8] sm:$0xff]
    %v1017 = vld [vmem:[#allocation4 + $0x10] sm:$0xff]
    %v1018 = vld [vmem:[#allocation4 + $0x18] sm:$0xff]
    %v1019 = vld [vmem:[#allocation4 + $0x20] sm:$0xff]
    %v1020 = vld [vmem:[#allocation4 + $0x28] sm:$0xff]
    %v1021 = vld [vmem:[#allocation4 + $0x30] sm:$0xff]
    %v1022 = vld [vmem:[#allocation4 + $0x38] sm:$0xff]
    %v1023 = vld [vmem:[#allocation4 + $0x40] sm:$0xff]
    %v1024 = vld [vmem:[#allocation4 + $0x48] sm:$0xff]
    %v1025 = vld [vmem:[#allocation4 + $0x50] sm:$0xff]
    %v1026 = vld [vmem:[#allocation4 + $0x58] sm:$0xff]
    %v1027 = vld [vmem:[#allocation4 + $0x60] sm:$0xff]
    %v1028 = vld [vmem:[#allocation4 + $0x68] sm:$0xff]
    %v1029 = vld [vmem:[#allocation4 + $0x70] sm:$0xff]
    %v1030 = vld [vmem:[#allocation4 + $0x78] sm:$0xff]
    %v1031 = vld [vmem:[#allocation4 + $0x80] sm:$0xff]
    %v1032 = vld [vmem:[#allocation4 + $0x88] sm:$0xff]
    %v1033 = vld [vmem:[#allocation4 + $0x90] sm:$0xff]
    %v1034 = vld [vmem:[#allocation4 + $0x98] sm:$0xff]
    %v1035 = vld [vmem:[#allocation4 + $0xa0] sm:$0xff]
    %v1036 = vld [vmem:[#allocation4 + $0xa8] sm:$0xff]
    %v1037 = vld [vmem:[#allocation4 + $0xb0] sm:$0xff]
    %v1038 = vld [vmem:[#allocation4 + $0xb8] sm:$0xff]
    %v1039 = vld [vmem:[#allocation4 + $0xc0] sm:$0xff]
    %v1040 = vld [vmem:[#allocation4 + $0xc8] sm:$0xff]
    %v1041 = vld [vmem:[#allocation4 + $0xd0] sm:$0xff]
    %v1042 = vld [vmem:[#allocation4 + $0xd8] sm:$0xff]
    %v1043 = vld [vmem:[#allocation4 + $0xe0] sm:$0xff]
    %v1044 = vld [vmem:[#allocation4 + $0xe8] sm:$0xff]
    %v1045 = vld [vmem:[#allocation4 + $0xf0] sm:$0xff]
    %v1046 = vld [vmem:[#allocation4 + $0xf8] sm:$0xff]
    %v1047 = vld [vmem:[#allocation4 + $0x100] sm:$0xff]
    %v1048 = vld [vmem:[#allocation4 + $0x108] sm:$0xff]
    %v1049 = vld [vmem:[#allocation4 + $0x110] sm:$0xff]
    %v1050 = vld [vmem:[#allocation4 + $0x118] sm:$0xff]
    %v1051 = vld [vmem:[#allocation4 + $0x120] sm:$0xff]
    %v1052 = vld [vmem:[#allocation4 + $0x128] sm:$0xff]
    %v1053 = vld [vmem:[#allocation4 + $0x130] sm:$0xff]
    %v1054 = vld [vmem:[#allocation4 + $0x138] sm:$0xff]
    %v1055 = vld [vmem:[#allocation4 + $0x140] sm:$0xff]
    %v1056 = vld [vmem:[#allocation4 + $0x148] sm:$0xff]
    %v1057 = vld [vmem:[#allocation4 + $0x150] sm:$0xff]
    %v1058 = vld [vmem:[#allocation4 + $0x158] sm:$0xff]
    %v1059 = vld [vmem:[#allocation4 + $0x160] sm:$0xff]
    %v1060 = vld [vmem:[#allocation4 + $0x168] sm:$0xff]
    %v1061 = vld [vmem:[#allocation4 + $0x170] sm:$0xff]
    %v1062 = vld [vmem:[#allocation4 + $0x178] sm:$0xff]
    %1063 = vmatpush.msra.mxu0 %v1060
    %1064 = vmatpush.msra.mxu0 %v1057
    %1065 = vmatpush.msra.mxu0 %v1054
    %1066 = vmatpush.msra.mxu0 %v1051
    %1067 = vmatpush.msra.mxu0 %v1048
    %1068 = vmatpush.msra.mxu0 %v1045
    %1069 = vmatpush.msra.mxu0 %v1042
    %1070 = vmatpush.msra.mxu0 %v1039
    %1071 = vmatpush.msra.mxu0 %v1036
    %1072 = vmatpush.msra.mxu0 %v1033
    %1073 = vmatpush.msra.mxu0 %v1030
    %1074 = vmatpush.msra.mxu0 %v1027
    %1075 = vmatpush.msra.mxu0 %v1024
    %1076 = vmatpush.msra.mxu0 %v1021
    %1077 = vmatpush.msra.mxu0 %v1018
    %1078 = vmatpush.msra.mxu0 %v1015
    %1079 = vmatmul.f32.gmra.mxu0 %v1006
    %v1080 = vpop.f32.mrf.mxu0
    %v1081 = vadd.f32 0.0, %v1080
    %1082 = vdwg.mxu0
    %1083 = vmatpush.msra.mxu0 %v1061
    %1084 = vmatpush.msra.mxu0 %v1058
    %1085 = vmatpush.msra.mxu0 %v1055
    %1086 = vmatpush.msra.mxu0 %v1052
    %1087 = vmatpush.msra.mxu0 %v1049
    %1088 = vmatpush.msra.mxu0 %v1046
    %1089 = vmatpush.msra.mxu0 %v1043
    %1090 = vmatpush.msra.mxu0 %v1040
    %1091 = vmatpush.msra.mxu0 %v1037
    %1092 = vmatpush.msra.mxu0 %v1034
    %1093 = vmatpush.msra.mxu0 %v1031
    %1094 = vmatpush.msra.mxu0 %v1028
    %1095 = vmatpush.msra.mxu0 %v1025
    %1096 = vmatpush.msra.mxu0 %v1022
    %1097 = vmatpush.msra.mxu0 %v1019
    %1098 = vmatpush.msra.mxu0 %v1016
    %1099 = vmatmul.f32.gmra.mxu0 %v1006
    %v1100 = vpop.f32.mrf.mxu0
    %v1101 = vadd.f32 0.0, %v1100
    %1102 = vdwg.mxu0
    %1103 = vmatpush.msra.mxu0 %v1062
    %1104 = vmatpush.msra.mxu0 %v1059
    %1105 = vmatpush.msra.mxu0 %v1056
    %1106 = vmatpush.msra.mxu0 %v1053
    %1107 = vmatpush.msra.mxu0 %v1050
    %1108 = vmatpush.msra.mxu0 %v1047
    %1109 = vmatpush.msra.mxu0 %v1044
    %1110 = vmatpush.msra.mxu0 %v1041
    %1111 = vmatpush.msra.mxu0 %v1038
    %1112 = vmatpush.msra.mxu0 %v1035
    %1113 = vmatpush.msra.mxu0 %v1032
    %1114 = vmatpush.msra.mxu0 %v1029
    %1115 = vmatpush.msra.mxu0 %v1026
    %1116 = vmatpush.msra.mxu0 %v1023
    %1117 = vmatpush.msra.mxu0 %v1020
    %1118 = vmatpush.msra.mxu0 %v1017
    %1119 = vmatmul.f32.gmra.mxu0 %v1006
    %v1120 = vpop.f32.mrf.mxu0
    %v1121 = vadd.f32 0.0, %v1120
    %1122 = vdwg.mxu0
    %v1123 = vadd.f32 %v1012, %v1081
    %v1124 = vmul.f32 %v1123, 0.5
    %v1125 = vtanh.pop %v1124
    %v1126 = vmul.f32 %v1125, 0.5
    %v1127 = vadd.f32 %v1126, 0.5
    %v1128 = vadd.f32 %v1013, %v1101
    %v1129 = vmul.f32 %v1128, 0.5
    %v1130 = vtanh.pop %v1129
    %v1131 = vmul.f32 %v1130, 0.5
    %v1132 = vadd.f32 %v1131, 0.5
    %v1133 = vadd.f32 %v1121, %v209
    %v1134 = vmul.f32 %v1127, %v1133
    %v1135 = vadd.f32 %v1014, %v1134
    %v1136 = vtanh.pop %v1135
    %v1137 = vsub.f32 %v1006, %v1136
    %v1138 = vmul.f32 %v1132, %v1137
    %v1139 = vadd.f32 %v1136, %v1138
    %s1140 = scalar_lea.vmem [#allocation3], 48
    %1141 = vst [vmem:[%s1140] sm:$0xff] %v1139
    %s1142 = smul.u32 7, 3
    %s1143 = smul.addr %s1142, 8
    %s1144 = scalar_lea.vmem [#allocation2], %s1143
    %v1145 = vld [vmem:[%s1144] sm:$0xff]
    %v1146 = vld [vmem:[%s1144 + $0x8] sm:$0xff]
    %v1147 = vld [vmem:[%s1144 + $0x10] sm:$0xff]
    %v1148 = vld [vmem:[#allocation4] sm:$0xff]
    %v1149 = vld [vmem:[#allocation4 + $0x8] sm:$0xff]
    %v1150 = vld [vmem:[#allocation4 + $0x10] sm:$0xff]
    %v1151 = vld [vmem:[#allocation4 + $0x18] sm:$0xff]
    %v1152 = vld [vmem:[#allocation4 + $0x20] sm:$0xff]
    %v1153 = vld [vmem:[#allocation4 + $0x28] sm:$0xff]
    %v1154 = vld [vmem:[#allocation4 + $0x30] sm:$0xff]
    %v1155 = vld [vmem:[#allocation4 + $0x38] sm:$0xff]
    %v1156 = vld [vmem:[#allocation4 + $0x40] sm:$0xff]
    %v1157 = vld [vmem:[#allocation4 + $0x48] sm:$0xff]
    %v1158 = vld [vmem:[#allocation4 + $0x50] sm:$0xff]
    %v1159 = vld [vmem:[#allocation4 + $0x58] sm:$0xff]
    %v1160 = vld [vmem:[#allocation4 + $0x60] sm:$0xff]
    %v1161 = vld [vmem:[#allocation4 + $0x68] sm:$0xff]
    %v1162 = vld [vmem:[#allocation4 + $0x70] sm:$0xff]
    %v1163 = vld [vmem:[#allocation4 + $0x78] sm:$0xff]
    %v1164 = vld [vmem:[#allocation4 + $0x80] sm:$0xff]
    %v1165 = vld [vmem:[#allocation4 + $0x88] sm:$0xff]
    %v1166 = vld [vmem:[#allocation4 + $0x90] sm:$0xff]
    %v1167 = vld [vmem:[#allocation4 + $0x98] sm:$0xff]
    %v1168 = vld [vmem:[#allocation4 + $0xa0] sm:$0xff]
    %v1169 = vld [vmem:[#allocation4 + $0xa8] sm:$0xff]
    %v1170 = vld [vmem:[#allocation4 + $0xb0] sm:$0xff]
    %v1171 = vld [vmem:[#allocation4 + $0xb8] sm:$0xff]
    %v1172 = vld [vmem:[#allocation4 + $0xc0] sm:$0xff]
    %v1173 = vld [vmem:[#allocation4 + $0xc8] sm:$0xff]
    %v1174 = vld [vmem:[#allocation4 + $0xd0] sm:$0xff]
    %v1175 = vld [vmem:[#allocation4 + $0xd8] sm:$0xff]
    %v1176 = vld [vmem:[#allocation4 + $0xe0] sm:$0xff]
    %v1177 = vld [vmem:[#allocation4 + $0xe8] sm:$0xff]
    %v1178 = vld [vmem:[#allocation4 + $0xf0] sm:$0xff]
    %v1179 = vld [vmem:[#allocation4 + $0xf8] sm:$0xff]
    %v1180 = vld [vmem:[#allocation4 + $0x100] sm:$0xff]
    %v1181 = vld [vmem:[#allocation4 + $0x108] sm:$0xff]
    %v1182 = vld [vmem:[#allocation4 + $0x110] sm:$0xff]
    %v1183 = vld [vmem:[#allocation4 + $0x118] sm:$0xff]
    %v1184 = vld [vmem:[#allocation4 + $0x120] sm:$0xff]
    %v1185 = vld [vmem:[#allocation4 + $0x128] sm:$0xff]
    %v1186 = vld [vmem:[#allocation4 + $0x130] sm:$0xff]
    %v1187 = vld [vmem:[#allocation4 + $0x138] sm:$0xff]
    %v1188 = vld [vmem:[#allocation4 + $0x140] sm:$0xff]
    %v1189 = vld [vmem:[#allocation4 + $0x148] sm:$0xff]
    %v1190 = vld [vmem:[#allocation4 + $0x150] sm:$0xff]
    %v1191 = vld [vmem:[#allocation4 + $0x158] sm:$0xff]
    %v1192 = vld [vmem:[#allocation4 + $0x160] sm:$0xff]
    %v1193 = vld [vmem:[#allocation4 + $0x168] sm:$0xff]
    %v1194 = vld [vmem:[#allocation4 + $0x170] sm:$0xff]
    %v1195 = vld [vmem:[#allocation4 + $0x178] sm:$0xff]
    %1196 = vmatpush.msra.mxu0 %v1193
    %1197 = vmatpush.msra.mxu0 %v1190
    %1198 = vmatpush.msra.mxu0 %v1187
    %1199 = vmatpush.msra.mxu0 %v1184
    %1200 = vmatpush.msra.mxu0 %v1181
    %1201 = vmatpush.msra.mxu0 %v1178
    %1202 = vmatpush.msra.mxu0 %v1175
    %1203 = vmatpush.msra.mxu0 %v1172
    %1204 = vmatpush.msra.mxu0 %v1169
    %1205 = vmatpush.msra.mxu0 %v1166
    %1206 = vmatpush.msra.mxu0 %v1163
    %1207 = vmatpush.msra.mxu0 %v1160
    %1208 = vmatpush.msra.mxu0 %v1157
    %1209 = vmatpush.msra.mxu0 %v1154
    %1210 = vmatpush.msra.mxu0 %v1151
    %1211 = vmatpush.msra.mxu0 %v1148
    %1212 = vmatmul.f32.gmra.mxu0 %v1139
    %v1213 = vpop.f32.mrf.mxu0
    %v1214 = vadd.f32 0.0, %v1213
    %1215 = vdwg.mxu0
    %1216 = vmatpush.msra.mxu0 %v1194
    %1217 = vmatpush.msra.mxu0 %v1191
    %1218 = vmatpush.msra.mxu0 %v1188
    %1219 = vmatpush.msra.mxu0 %v1185
    %1220 = vmatpush.msra.mxu0 %v1182
    %1221 = vmatpush.msra.mxu0 %v1179
    %1222 = vmatpush.msra.mxu0 %v1176
    %1223 = vmatpush.msra.mxu0 %v1173
    %1224 = vmatpush.msra.mxu0 %v1170
    %1225 = vmatpush.msra.mxu0 %v1167
    %1226 = vmatpush.msra.mxu0 %v1164
    %1227 = vmatpush.msra.mxu0 %v1161
    %1228 = vmatpush.msra.mxu0 %v1158
    %1229 = vmatpush.msra.mxu0 %v1155
    %1230 = vmatpush.msra.mxu0 %v1152
    %1231 = vmatpush.msra.mxu0 %v1149
    %1232 = vmatmul.f32.gmra.mxu0 %v1139
    %v1233 = vpop.f32.mrf.mxu0
    %v1234 = vadd.f32 0.0, %v1233
    %1235 = vdwg.mxu0
    %1236 = vmatpush.msra.mxu0 %v1195
    %1237 = vmatpush.msra.mxu0 %v1192
    %1238 = vmatpush.msra.mxu0 %v1189
    %1239 = vmatpush.msra.mxu0 %v1186
    %1240 = vmatpush.msra.mxu0 %v1183
    %1241 = vmatpush.msra.mxu0 %v1180
    %1242 = vmatpush.msra.mxu0 %v1177
    %1243 = vmatpush.msra.mxu0 %v1174
    %1244 = vmatpush.msra.mxu0 %v1171
    %1245 = vmatpush.msra.mxu0 %v1168
    %1246 = vmatpush.msra.mxu0 %v1165
    %1247 = vmatpush.msra.mxu0 %v1162
    %1248 = vmatpush.msra.mxu0 %v1159
    %1249 = vmatpush.msra.mxu0 %v1156
    %1250 = vmatpush.msra.mxu0 %v1153
    %1251 = vmatpush.msra.mxu0 %v1150
    %1252 = vmatmul.f32.gmra.mxu0 %v1139
    %v1253 = vpop.f32.mrf.mxu0
    %v1254 = vadd.f32 0.0, %v1253
    %1255 = vdwg.mxu0
    %v1256 = vadd.f32 %v1145, %v1214
    %v1257 = vmul.f32 %v1256, 0.5
    %v1258 = vtanh.pop %v1257
    %v1259 = vmul.f32 %v1258, 0.5
    %v1260 = vadd.f32 %v1259, 0.5
    %v1261 = vadd.f32 %v1146, %v1234
    %v1262 = vmul.f32 %v1261, 0.5
    %v1263 = vtanh.pop %v1262
    %v1264 = vmul.f32 %v1263, 0.5
    %v1265 = vadd.f32 %v1264, 0.5
    %v1266 = vadd.f32 %v1254, %v209
    %v1267 = vmul.f32 %v1260, %v1266
    %v1268 = vadd.f32 %v1147, %v1267
    %v1269 = vtanh.pop %v1268
    %v1270 = vsub.f32 %v1139, %v1269
    %v1271 = vmul.f32 %v1265, %v1270
    %v1272 = vadd.f32 %v1269, %v1271
    %s1273 = scalar_lea.vmem [#allocation3], 56
    %1274 = vst [vmem:[%s1273] sm:$0xff] %v1272
    %1275 = vst [vmem:[#allocation10] sm:$0xff] %v1272
    %v1276 = vld [vmem:[#allocation3] sm:$0xff]
    %v1277 = vld [vmem:[#allocation3 + $0x8] sm:$0xff]
    %v1278 = vld [vmem:[#allocation3 + $0x10] sm:$0xff]
    %v1279 = vld [vmem:[#allocation3 + $0x18] sm:$0xff]
    %v1280 = vld [vmem:[#allocation3 + $0x20] sm:$0xff]
    %v1281 = vld [vmem:[#allocation3 + $0x28] sm:$0xff]
    %v1282 = vld [vmem:[#allocation3 + $0x30] sm:$0xff]
    %v1283 = vld [vmem:[#allocation3 + $0x38] sm:$0xff]
    %v1284 = vld [vmem:[#allocation7] sm:$0xff]
    %v1285 = vld [vmem:[#allocation7 + $0x8] sm:$0xff]
    %v1286 = vld [vmem:[#allocation7 + $0x10] sm:$0xff]
    %v1287 = vld [vmem:[#allocation7 + $0x18] sm:$0xff]
    %v1288 = vld [vmem:[#allocation7 + $0x20] sm:$0xff]
    %v1289 = vld [vmem:[#allocation7 + $0x28] sm:$0xff]
    %v1290 = vld [vmem:[#allocation7 + $0x30] sm:$0xff]
    %v1291 = vld [vmem:[#allocation7 + $0x38] sm:$0xff]
    %v1292 = vld [vmem:[#allocation7 + $0x40] sm:$0xff]
    %v1293 = vld [vmem:[#allocation7 + $0x48] sm:$0xff]
    %v1294 = vld [vmem:[#allocation7 + $0x50] sm:$0xff]
    %v1295 = vld [vmem:[#allocation7 + $0x58] sm:$0xff]
    %v1296 = vld [vmem:[#allocation7 + $0x60] sm:$0xff]
    %v1297 = vld [vmem:[#allocation7 + $0x68] sm:$0xff]
    %v1298 = vld [vmem:[#allocation7 + $0x70] sm:$0xff]
    %v1299 = vld [vmem:[#allocation7 + $0x78] sm:$0xff]
    %v1300 = vld [vmem:[%s7] sm:$0x1]
    %v1302 = vperm.slane %v1300, 0
    %1304 = vmatpush.msra.mxu0 %v1299
    %1305 = vmatpush.msra.mxu0 %v1298
    %1306 = vmatpush.msra.mxu0 %v1297
    %1307 = vmatpush.msra.mxu0 %v1296
    %1308 = vmatpush.msra.mxu0 %v1295
    %1309 = vmatpush.msra.mxu0 %v1294
    %1310 = vmatpush.msra.mxu0 %v1293
    %1311 = vmatpush.msra.mxu0 %v1292
    %1312 = vmatpush.msra.mxu0 %v1291
    %1313 = vmatpush.msra.mxu0 %v1290
    %1314 = vmatpush.msra.mxu0 %v1289
    %1315 = vmatpush.msra.mxu0 %v1288
    %1316 = vmatpush.msra.mxu0 %v1287
    %1317 = vmatpush.msra.mxu0 %v1286
    %1318 = vmatpush.msra.mxu0 %v1285
    %1319 = vmatpush.msra.mxu0 %v1284
    %1320 = vmatmul.f32.gmra.mxu0 %v1276
    %v1321 = vpop.f32.mrf.mxu0
    %v1322 = vadd.f32 %v1302, %v1321
    %1323 = vmatmul.f32.gmra.mxu0 %v1277
    %v1324 = vpop.f32.mrf.mxu0
    %v1325 = vadd.f32 %v1302, %v1324
    %1326 = vmatmul.f32.gmra.mxu0 %v1278
    %v1327 = vpop.f32.mrf.mxu0
    %v1328 = vadd.f32 %v1302, %v1327
    %1329 = vmatmul.f32.gmra.mxu0 %v1279
    %v1330 = vpop.f32.mrf.mxu0
    %v1331 = vadd.f32 %v1302, %v1330
    %1332 = vmatmul.f32.gmra.mxu0 %v1280
    %v1333 = vpop.f32.mrf.mxu0
    %v1334 = vadd.f32 %v1302, %v1333
    %1335 = vmatmul.f32.gmra.mxu0 %v1281
    %v1336 = vpop.f32.mrf.mxu0
    %v1337 = vadd.f32 %v1302, %v1336
    %1338 = vmatmul.f32.gmra.mxu0 %v1282
    %v1339 = vpop.f32.mrf.mxu0
    %v1340 = vadd.f32 %v1302, %v1339
    %1341 = vmatmul.f32.gmra.mxu0 %v1283
    %v1342 = vpop.f32.mrf.mxu0
    %v1343 = vadd.f32 %v1302, %v1342
    %1344 = vdwg.mxu0
    %1345 = vst [vmem:[#allocation9] sm:$0xff] %v1322
    %1346 = vst [vmem:[#allocation9 + $0x8] sm:$0xff] %v1325
    %1347 = vst [vmem:[#allocation9 + $0x10] sm:$0xff] %v1328
    %1348 = vst [vmem:[#allocation9 + $0x18] sm:$0xff] %v1331
    %1349 = vst [vmem:[#allocation9 + $0x20] sm:$0xff] %v1334
    %1350 = vst [vmem:[#allocation9 + $0x28] sm:$0xff] %v1337
    %1351 = vst [vmem:[#allocation9 + $0x30] sm:$0xff] %v1340
    %1352 = vst [vmem:[#allocation9 + $0x38] sm:$0xff] %v1343
    // Predicated region
    $region46: #{tpu_custom_call.1} parent=1 // pred_check
      _
    $region47: #{tpu_custom_call.1} parent=1 // pred_check_branch
      %1354 = sbr.rel (0) target = $region49
    $region48: #{tpu_custom_call.1} parent=1 // pred_region
      %1356 = vsyncadd [#allocation6], 0
      %s1357 = sshll.u32 [#allocation9], 4
      %s1358 = int_to_ptr.vmem [resolvable:$true] %s1357
      %s1359 = sshll.u32 %s8, 4
      %s1360 = int_to_ptr.hbm [resolvable:$true] %s1359
      %1365 = dma.vmem_to_hbm [thread:$0]  %s1358, 1024, %s1360, [#allocation6], 128, 128, 8
    $region49: #{tpu_custom_call.1} parent=1 // pred_fallthru
      _
    // Predicated region
    $region50: #{tpu_custom_call.1} parent=1 // pred_check
      _
    $region51: #{tpu_custom_call.1} parent=1 // pred_check_branch
      %1367 = sbr.rel (0) target = $region53
    $region52: #{tpu_custom_call.1} parent=1 // pred_region
      %1369 = vsyncadd [#allocation11], 0
      %s1371 = sshll.u32 [#allocation10], 4
      %s1372 = int_to_ptr.vmem [resolvable:$true] %s1371
      %s1373 = sshll.u32 %s9, 4
      %s1374 = int_to_ptr.hbm [resolvable:$true] %s1373
      %1376 = dma.vmem_to_hbm [thread:$0]  %s1372, 128, %s1374, [#allocation11]
    $region53: #{tpu_custom_call.1} parent=1 // pred_fallthru
      _
    // Predicated region
    $region54: #{tpu_custom_call.1} parent=1 // pred_check
      _
    $region55: #{tpu_custom_call.1} parent=1 // pred_check_branch
      %1378 = sbr.rel (0) target = $region57
    $region56: #{tpu_custom_call.1} parent=1 // pred_region
      %1380 = dma.done [#allocation6], 1024
    $region57: #{tpu_custom_call.1} parent=1 // pred_fallthru
      _
    // Predicated region
    $region58: #{tpu_custom_call.1} parent=1 // pred_check
      _
    $region59: #{tpu_custom_call.1} parent=1 // pred_check_branch
      %1382 = sbr.rel (0) target = $region61
    $region60: #{tpu_custom_call.1} parent=1 // pred_region
      %1384 = dma.done [#allocation11], 128
    $region61: #{tpu_custom_call.1} parent=1 // pred_fallthru
      _
    %1385 = vsyncpa [#allocation5], 1
    %1386 = vsyncpa [#allocation8], 1
    %1387 = vsyncpa [#allocation6], 1
    %1388 = vsyncpa [#allocation11], 1

</llo_original>
